<compile_context>
chip_gen: v5e
topology: v5e:2x2
jax: 0.10.0
libtpu: 0.0.40
codegen_flags: <defaults>
</compile_context>

<pallas_src>
import functools

import jax
import jax.numpy as jnp
import numpy as np
from jax.experimental import pallas as pl
from jax.experimental.pallas import tpu as pltpu


def _ceil_to(x, m):
    return ((x + m - 1) // m) * m


# ----------------------------------------------------------------------------
# Fused DecBlock kernel (one batch element per grid step).
# All in-kernel activations are (C, H*W): channels on sublanes, spatial on lanes.
# ----------------------------------------------------------------------------
def _dec_block_kernel(x1_ref, x2_ref, g_ref, m_ref, wd_ref, bd_ref,
                      w1_ref, b1_ref, w2_ref, b2_ref, wo_ref, bo_ref,
                      out_ref, *, W, P, C1p, C2p):
    f32 = jnp.float32
    mxu = jnp.bfloat16            # MXU operand dtype; accumulation stays f32
    HALO = 128                    # lane-aligned zero halo for tap extraction

    def mm(a, b):
        return jnp.dot(a.astype(mxu), b.astype(mxu), preferred_element_type=f32)

    def im2col(act, cp):
        """3x3 zero-pad taps of a (cp, P) f32 map -> (9*cp, P) f32 im2col rows.

        Tap (dy, dx) at flat position p is act[p + dy*W + dx]; the lane shift is
        a static slice of a zero-extended copy, and the constant 0/1 mask kills
        row/column wrap-around (== the conv's zero padding)."""
        zero = jnp.zeros((cp, HALO), f32)
        ext = jnp.concatenate([zero, act, zero], axis=1)        # (cp, P + 256)
        rows = []
        t = 0
        for dy in (-1, 0, 1):
            for dx in (-1, 0, 1):
                s = dy * W + dx
                rows.append(ext[:, HALO + s:HALO + s + P] * m_ref[t])
                t += 1
        return jnp.concatenate(rows, axis=0)                    # (9*cp, P)

    # ---- ConvTranspose2d(C2, C2, k=2, s=2): one channel-mixing matmul covering
    # ---- all 4 sub-pixel phases, then 4 constant 0/1 scatter matmuls that fold
    # ---- the 2x2 interleave and the bottom/right replicate pad.  The deconv
    # ---- bias initialises the accumulator (every output pixel gets it once).
    yall = mm(wd_ref[...], x2_ref[0])                           # (4*C2p, H2*W2)
    xup = jnp.broadcast_to(bd_ref[...], (C2p, P))               # (C2p, P) f32
    for d in range(4):
        xup = xup + mm(yall[d * C2p:(d + 1) * C2p], g_ref[d])

    # ---- ResBlock.conv1 over the implicit concat [x1 | upsampled x2]:
    # ---- the channel concat becomes a K-dim concat of two im2col blocks.
    cols1 = jnp.concatenate([im2col(x1_ref[0], C1p), im2col(xup, C2p)], axis=0)
    h = jnp.maximum(mm(w1_ref[...], cols1) + b1_ref[...], 0.0)  # (C2p, P)

    # ---- ResBlock.conv2 + residual ReLU
    y = jnp.maximum(h + mm(w2_ref[...], im2col(h, C2p)) + b2_ref[...], 0.0)

    # ---- conv_out (+ folded BN + ReLU), lane-dense store
    o = jnp.maximum(mm(wo_ref[...], im2col(y, C2p)) + bo_ref[...], 0.0)
    out_ref[0] = o.astype(out_ref.dtype)


# ----------------------------------------------------------------------------
# Constant matrices (built once per shape at trace time).
# ----------------------------------------------------------------------------
def _build_scatter(H, W, H2, W2):
    """(4, H2*W2, H*W) 0/1: deconv output pixel (per sub-pixel phase) -> final
    H x W position, including the bottom/right replicate padding."""
    g = np.zeros((4, H2 * W2, H * W), np.float32)
    for Y in range(H):
        Yc = min(Y, 2 * H2 - 1)
        for X in range(W):
            Xc = min(X, 2 * W2 - 1)
            d = (Yc % 2) * 2 + (Xc % 2)
            g[d, (Yc // 2) * W2 + (Xc // 2), Y * W + X] = 1.0
    return g


def _build_tap_masks(H, W):
    """(9, 1, H*W) 0/1 validity of tap (dy, dx) at each position (zero pad)."""
    m = np.zeros((9, 1, H * W), np.float32)
    t = 0
    for dy in (-1, 0, 1):
        for dx in (-1, 0, 1):
            for y in range(H):
                for x in range(W):
                    if 0 <= y + dy < H and 0 <= x + dx < W:
                        m[t, 0, y * W + x] = 1.0
            t += 1
    return m


def _conv_weight_mat(w_oihw, cin_pad, cout_pad):
    """(Cout, Cin, 3, 3) -> (cout_pad, 9*cin_pad) matching the im2col row order
    (tap-major, channel-minor), with zero-padded input/output channels."""
    co, ci = w_oihw.shape[0], w_oihw.shape[1]
    w = jnp.transpose(w_oihw, (0, 2, 3, 1))                     # (Cout, ky, kx, Cin)
    w = jnp.pad(w, ((0, cout_pad - co), (0, 0), (0, 0), (0, cin_pad - ci)))
    return w.reshape(cout_pad, 9 * cin_pad)


def _const_spec(a):
    return pl.BlockSpec(a.shape, lambda n, nd=a.ndim: (0,) * nd)


# ----------------------------------------------------------------------------
# DecBlock forward (single fused pallas_call)
# ----------------------------------------------------------------------------
@jax.jit
def dec_block_forward(p, x1, x2):
    """x1: (N, in_ch1, H, W), x2: (N, in_ch2, H2, W2)  (NCHW, like PyTorch).
    Returns (N, out_ch, H, W)."""
    N, C1, H, W = x1.shape
    N2, C2, H2, W2 = x2.shape
    assert N == N2
    # PyTorch F.pad 'replicate' with negative padding (cropping) is unsupported.
    assert H >= 2 * H2 and W >= 2 * W2, (x1.shape, x2.shape)
    Co = p["out_w"].shape[0]
    P, P2 = H * W, H2 * W2
    C1p, C2p = _ceil_to(C1, 8), _ceil_to(C2, 8)
    mxu = jnp.bfloat16

    # Lane-dense activation layout: (N, C, H*W), channels padded to 8 sublanes.
    x1f = jnp.pad(x1.reshape(N, C1, P), ((0, 0), (0, C1p - C1), (0, 0)))
    x2f = x2.reshape(N, C2, P2)

    # ConvTranspose2d weight (Cin, Cout, 2, 2) -> rows (ky*2+kx)*C2p + cout, cols cin.
    wd = jnp.transpose(p["deconv_w"], (2, 3, 1, 0))             # (ky, kx, co, ci)
    wd = jnp.pad(wd, ((0, 0), (0, 0), (0, C2p - C2), (0, 0)))
    wd = wd.reshape(4 * C2p, C2).astype(mxu)
    bd = jnp.pad(p["deconv_b"], (0, C2p - C2)).reshape(C2p, 1)

    # ResBlock.conv1 weight split into its x1 part and its upsampled-x2 part.
    w1 = p["rb_w1"]                                             # (C2, C1+C2, 3, 3)
    w1m = jnp.concatenate([_conv_weight_mat(w1[:, :C1], C1p, C2p),
                           _conv_weight_mat(w1[:, C1:], C2p, C2p)],
                          axis=1).astype(mxu)
    b1 = jnp.pad(p["rb_b1"], (0, C2p - C2)).reshape(C2p, 1)
    w2m = _conv_weight_mat(p["rb_w2"], C2p, C2p).astype(mxu)
    b2 = jnp.pad(p["rb_b2"], (0, C2p - C2)).reshape(C2p, 1)
    wom = _conv_weight_mat(p["out_w"], C2p, Co).astype(mxu)
    bo = p["out_b"].reshape(Co, 1)

    # Constant 0/1 scatter (deconv interleave + replicate pad) and tap masks.
    g = jnp.asarray(_build_scatter(H, W, H2, W2), mxu)
    masks = jnp.asarray(_build_tap_masks(H, W), jnp.float32)

    kernel = functools.partial(_dec_block_kernel, W=W, P=P, C1p=C1p, C2p=C2p)

    out = pl.pallas_call(
        kernel,
        out_shape=jax.ShapeDtypeStruct((N, Co, P), jnp.float32),
        grid=(N,),
        in_specs=[
            pl.BlockSpec((1, C1p, P), lambda n: (n, 0, 0)),
            pl.BlockSpec((1, C2, P2), lambda n: (n, 0, 0)),
            _const_spec(g), _const_spec(masks),
            _const_spec(wd), _const_spec(bd),
            _const_spec(w1m), _const_spec(b1),
            _const_spec(w2m), _const_spec(b2),
            _const_spec(wom), _const_spec(bo),
        ],
        out_specs=pl.BlockSpec((1, Co, P), lambda n: (n, 0, 0)),
        compiler_params=pltpu.CompilerParams(
            dimension_semantics=("parallel",)),
    )(x1f, x2f, g, masks, wd, bd, w1m, b1, w2m, b2, wom, bo)

    return out.reshape(N, Co, H, W)


# ----------------------------------------------------------------------------
# Parameter setup (deterministic, synthetic) and eval-mode BN folding
# ----------------------------------------------------------------------------
def _fold_bn(w_oihw, gamma, beta, mean, var, eps=1e-5):
    scale = gamma / jnp.sqrt(var + eps)                          # (Cout,)
    return w_oihw * scale[:, None, None, None], beta - mean * scale


def _conv_bn_params(key, cin, cout, k=3):
    kw, kg, kb, km, kv = jax.random.split(key, 5)
    fan_in = cin * k * k
    w = jax.random.normal(kw, (cout, cin, k, k), jnp.float32) * jnp.sqrt(2.0 / fan_in)
    gamma = 1.0 + 0.1 * jax.random.normal(kg, (cout,), jnp.float32)
    beta = 0.1 * jax.random.normal(kb, (cout,), jnp.float32)
    mean = 0.1 * jax.random.normal(km, (cout,), jnp.float32)
    var = jax.random.uniform(kv, (cout,), jnp.float32, minval=0.5, maxval=1.5)
    return _fold_bn(w, gamma, beta, mean, var)


def init_params(key, in_ch1, in_ch2, out_ch):
    k0, k1, k2, k3, k4 = jax.random.split(key, 5)
    # nn.ConvTranspose2d(in_ch2, in_ch2, 2, stride=2): weight (Cin, Cout, 2, 2) + bias.
    deconv_w = jax.random.normal(k0, (in_ch2, in_ch2, 2, 2), jnp.float32) * jnp.sqrt(
        1.0 / (in_ch2 * 4))
    deconv_b = 0.1 * jax.random.normal(k1, (in_ch2,), jnp.float32)
    rb_w1, rb_b1 = _conv_bn_params(k2, in_ch1 + in_ch2, in_ch2)   # ResBlock.conv1 (+ReLU)
    rb_w2, rb_b2 = _conv_bn_params(k3, in_ch2, in_ch2)            # ResBlock.conv2
    out_w, out_b = _conv_bn_params(k4, in_ch2, out_ch)            # conv_out (+BN+ReLU)
    return dict(deconv_w=deconv_w, deconv_b=deconv_b,
                rb_w1=rb_w1, rb_b1=rb_b1, rb_w2=rb_w2, rb_b2=rb_b2,
                out_w=out_w, out_b=out_b)


if __name__ == "__main__":
    in_ch1, in_ch2, out_ch = 4, 8, 4
    N, H1, W1 = 2, 16, 16
    H2, W2 = 8, 8

    key = jax.random.PRNGKey(0)
    k_x1, k_x2, k_p = jax.random.split(key, 3)
    x1 = jax.random.normal(k_x1, (N, in_ch1, H1, W1), jnp.float32)   # NCHW
    x2 = jax.random.normal(k_x2, (N, in_ch2, H2, W2), jnp.float32)   # NCHW
    params = init_params(k_p, in_ch1, in_ch2, out_ch)

    out = dec_block_forward(params, x1, x2)
    jax.block_until_ready(out)
    assert out.shape == (N, out_ch, H1, W1), out.shape
    print("KERNEL_OK")
</pallas_src>

<mosaic_0001>
module attributes {stable_mosaic.version = 11 : i64} {
  func.func @_dec_block_kernel(%arg0: i32, %arg1: memref<1x8x256xf32, #tpu.memory_space<vmem>>, %arg2: memref<1x8x64xf32, #tpu.memory_space<vmem>>, %arg3: memref<4x64x256xbf16, #tpu.memory_space<vmem>>, %arg4: memref<9x1x256xf32, #tpu.memory_space<vmem>>, %arg5: memref<32x8xbf16, #tpu.memory_space<vmem>>, %arg6: memref<8x1xf32, #tpu.memory_space<vmem>>, %arg7: memref<8x144xbf16, #tpu.memory_space<vmem>>, %arg8: memref<8x1xf32, #tpu.memory_space<vmem>>, %arg9: memref<8x72xbf16, #tpu.memory_space<vmem>>, %arg10: memref<8x1xf32, #tpu.memory_space<vmem>>, %arg11: memref<4x72xbf16, #tpu.memory_space<vmem>>, %arg12: memref<4x1xf32, #tpu.memory_space<vmem>>, %arg13: memref<1x4x256xf32, #tpu.memory_space<vmem>>) attributes {dimension_semantics = [#tpu.dimension_semantics<parallel>], iteration_bounds = array<i64: 2>, scalar_prefetch = 0 : i64, scratch_operands = 0 : i64, tpu.core_type = #tpu.core_type<tc>, window_params = [{transform_indices = @transform_0, window_bounds = array<i64: 1, 8, 256>}, {transform_indices = @transform_1, window_bounds = array<i64: 1, 8, 64>}, {pipeline_mode = #tpu.pipeline_mode<synchronous>, transform_indices = @transform_2, window_bounds = array<i64: 4, 64, 256>}, {pipeline_mode = #tpu.pipeline_mode<synchronous>, transform_indices = @transform_3, window_bounds = array<i64: 9, 1, 256>}, {pipeline_mode = #tpu.pipeline_mode<synchronous>, transform_indices = @transform_4, window_bounds = array<i64: 32, 8>}, {pipeline_mode = #tpu.pipeline_mode<synchronous>, transform_indices = @transform_5, window_bounds = array<i64: 8, 1>}, {pipeline_mode = #tpu.pipeline_mode<synchronous>, transform_indices = @transform_6, window_bounds = array<i64: 8, 144>}, {pipeline_mode = #tpu.pipeline_mode<synchronous>, transform_indices = @transform_7, window_bounds = array<i64: 8, 1>}, {pipeline_mode = #tpu.pipeline_mode<synchronous>, transform_indices = @transform_8, window_bounds = array<i64: 8, 72>}, {pipeline_mode = #tpu.pipeline_mode<synchronous>, transform_indices = @transform_9, window_bounds = array<i64: 8, 1>}, {pipeline_mode = #tpu.pipeline_mode<synchronous>, transform_indices = @transform_10, window_bounds = array<i64: 4, 72>}, {pipeline_mode = #tpu.pipeline_mode<synchronous>, transform_indices = @transform_11, window_bounds = array<i64: 4, 1>}, {transform_indices = @transform_12, window_bounds = array<i64: 1, 4, 256>}]} {
    %c0 = arith.constant 0 : index
    %c0_0 = arith.constant 0 : index
    %0 = vector.load %arg5[%c0, %c0_0] : memref<32x8xbf16, #tpu.memory_space<vmem>>, vector<32x8xbf16>
    %c0_1 = arith.constant 0 : index
    %c0_2 = arith.constant 0 : index
    %c0_3 = arith.constant 0 : index
    %1 = vector.load %arg2[%c0_1, %c0_2, %c0_3] : memref<1x8x64xf32, #tpu.memory_space<vmem>>, vector<1x8x64xf32>
    %2 = vector.shape_cast %1 : vector<1x8x64xf32> to vector<8x64xf32>
    %3 = arith.truncf %2 : vector<8x64xf32> to vector<8x64xbf16>
    %cst = arith.constant dense<0.000000e+00> : vector<32x64xf32>
    %4 = tpu.matmul %0, %3, %cst {dimension_numbers = #tpu.dot_dimension_numbers<[1], [0], [0], [1], [0, 0, 1, 1], [], []>} : vector<32x8xbf16>, vector<8x64xbf16>, vector<32x64xf32> -> vector<32x64xf32>
    %c0_4 = arith.constant 0 : index
    %c0_5 = arith.constant 0 : index
    %5 = vector.load %arg6[%c0_4, %c0_5] : memref<8x1xf32, #tpu.memory_space<vmem>>, vector<8x1xf32>
    %6 = vector.shape_cast %5 : vector<8x1xf32> to vector<8x1xf32>
    %7 = vector.broadcast %6 : vector<8x1xf32> to vector<8x256xf32>
    %8 = vector.extract_strided_slice %4 {offsets = [0, 0], sizes = [8, 64], strides = [1, 1]} : vector<32x64xf32> to vector<8x64xf32>
    %c0_6 = arith.constant 0 : index
    %c0_7 = arith.constant 0 : index
    %c0_8 = arith.constant 0 : index
    %9 = vector.load %arg3[%c0_6, %c0_7, %c0_8] : memref<4x64x256xbf16, #tpu.memory_space<vmem>>, vector<1x64x256xbf16>
    %10 = vector.shape_cast %9 : vector<1x64x256xbf16> to vector<64x256xbf16>
    %11 = arith.truncf %8 : vector<8x64xf32> to vector<8x64xbf16>
    %cst_9 = arith.constant dense<0.000000e+00> : vector<8x256xf32>
    %12 = tpu.matmul %11, %10, %cst_9 {dimension_numbers = #tpu.dot_dimension_numbers<[1], [0], [0], [1], [0, 0, 1, 1], [], []>} : vector<8x64xbf16>, vector<64x256xbf16>, vector<8x256xf32> -> vector<8x256xf32>
    %13 = arith.addf %7, %12 : vector<8x256xf32>
    %14 = vector.extract_strided_slice %4 {offsets = [8, 0], sizes = [8, 64], strides = [1, 1]} : vector<32x64xf32> to vector<8x64xf32>
    %c1 = arith.constant 1 : index
    %c0_10 = arith.constant 0 : index
    %c0_11 = arith.constant 0 : index
    %15 = vector.load %arg3[%c1, %c0_10, %c0_11] : memref<4x64x256xbf16, #tpu.memory_space<vmem>>, vector<1x64x256xbf16>
    %16 = vector.shape_cast %15 : vector<1x64x256xbf16> to vector<64x256xbf16>
    %17 = arith.truncf %14 : vector<8x64xf32> to vector<8x64xbf16>
    %cst_12 = arith.constant dense<0.000000e+00> : vector<8x256xf32>
    %18 = tpu.matmul %17, %16, %cst_12 {dimension_numbers = #tpu.dot_dimension_numbers<[1], [0], [0], [1], [0, 0, 1, 1], [], []>} : vector<8x64xbf16>, vector<64x256xbf16>, vector<8x256xf32> -> vector<8x256xf32>
    %19 = arith.addf %13, %18 : vector<8x256xf32>
    %20 = vector.extract_strided_slice %4 {offsets = [16, 0], sizes = [8, 64], strides = [1, 1]} : vector<32x64xf32> to vector<8x64xf32>
    %c2 = arith.constant 2 : index
    %c0_13 = arith.constant 0 : index
    %c0_14 = arith.constant 0 : index
    %21 = vector.load %arg3[%c2, %c0_13, %c0_14] : memref<4x64x256xbf16, #tpu.memory_space<vmem>>, vector<1x64x256xbf16>
    %22 = vector.shape_cast %21 : vector<1x64x256xbf16> to vector<64x256xbf16>
    %23 = arith.truncf %20 : vector<8x64xf32> to vector<8x64xbf16>
    %cst_15 = arith.constant dense<0.000000e+00> : vector<8x256xf32>
    %24 = tpu.matmul %23, %22, %cst_15 {dimension_numbers = #tpu.dot_dimension_numbers<[1], [0], [0], [1], [0, 0, 1, 1], [], []>} : vector<8x64xbf16>, vector<64x256xbf16>, vector<8x256xf32> -> vector<8x256xf32>
    %25 = arith.addf %19, %24 : vector<8x256xf32>
    %26 = vector.extract_strided_slice %4 {offsets = [24, 0], sizes = [8, 64], strides = [1, 1]} : vector<32x64xf32> to vector<8x64xf32>
    %c3 = arith.constant 3 : index
    %c0_16 = arith.constant 0 : index
    %c0_17 = arith.constant 0 : index
    %27 = vector.load %arg3[%c3, %c0_16, %c0_17] : memref<4x64x256xbf16, #tpu.memory_space<vmem>>, vector<1x64x256xbf16>
    %28 = vector.shape_cast %27 : vector<1x64x256xbf16> to vector<64x256xbf16>
    %29 = arith.truncf %26 : vector<8x64xf32> to vector<8x64xbf16>
    %cst_18 = arith.constant dense<0.000000e+00> : vector<8x256xf32>
    %30 = tpu.matmul %29, %28, %cst_18 {dimension_numbers = #tpu.dot_dimension_numbers<[1], [0], [0], [1], [0, 0, 1, 1], [], []>} : vector<8x64xbf16>, vector<64x256xbf16>, vector<8x256xf32> -> vector<8x256xf32>
    %31 = arith.addf %25, %30 : vector<8x256xf32>
    %c0_19 = arith.constant 0 : index
    %c0_20 = arith.constant 0 : index
    %c0_21 = arith.constant 0 : index
    %32 = vector.load %arg1[%c0_19, %c0_20, %c0_21] : memref<1x8x256xf32, #tpu.memory_space<vmem>>, vector<1x8x256xf32>
    %33 = vector.shape_cast %32 : vector<1x8x256xf32> to vector<8x256xf32>
    %cst_22 = arith.constant 0.000000e+00 : f32
    %34 = vector.broadcast %cst_22 : f32 to vector<8x128xf32>
    %35 = tpu.concatenate %34, %33, %34 in 1 : vector<8x128xf32>, vector<8x256xf32>, vector<8x128xf32> -> vector<8x512xf32>
    %36 = vector.extract_strided_slice %35 {offsets = [0, 111], sizes = [8, 256], strides = [1, 1]} : vector<8x512xf32> to vector<8x256xf32>
    %c0_23 = arith.constant 0 : index
    %c0_24 = arith.constant 0 : index
    %c0_25 = arith.constant 0 : index
    %37 = vector.load %arg4[%c0_23, %c0_24, %c0_25] : memref<9x1x256xf32, #tpu.memory_space<vmem>>, vector<1x1x256xf32>
    %38 = vector.shape_cast %37 : vector<1x1x256xf32> to vector<1x256xf32>
    %39 = vector.broadcast %38 : vector<1x256xf32> to vector<8x256xf32>
    %40 = arith.mulf %36, %39 : vector<8x256xf32>
    %41 = vector.extract_strided_slice %35 {offsets = [0, 112], sizes = [8, 256], strides = [1, 1]} : vector<8x512xf32> to vector<8x256xf32>
    %c1_26 = arith.constant 1 : index
    %c0_27 = arith.constant 0 : index
    %c0_28 = arith.constant 0 : index
    %42 = vector.load %arg4[%c1_26, %c0_27, %c0_28] : memref<9x1x256xf32, #tpu.memory_space<vmem>>, vector<1x1x256xf32>
    %43 = vector.shape_cast %42 : vector<1x1x256xf32> to vector<1x256xf32>
    %44 = vector.broadcast %43 : vector<1x256xf32> to vector<8x256xf32>
    %45 = arith.mulf %41, %44 : vector<8x256xf32>
    %46 = vector.extract_strided_slice %35 {offsets = [0, 113], sizes = [8, 256], strides = [1, 1]} : vector<8x512xf32> to vector<8x256xf32>
    %c2_29 = arith.constant 2 : index
    %c0_30 = arith.constant 0 : index
    %c0_31 = arith.constant 0 : index
    %47 = vector.load %arg4[%c2_29, %c0_30, %c0_31] : memref<9x1x256xf32, #tpu.memory_space<vmem>>, vector<1x1x256xf32>
    %48 = vector.shape_cast %47 : vector<1x1x256xf32> to vector<1x256xf32>
    %49 = vector.broadcast %48 : vector<1x256xf32> to vector<8x256xf32>
    %50 = arith.mulf %46, %49 : vector<8x256xf32>
    %51 = vector.extract_strided_slice %35 {offsets = [0, 127], sizes = [8, 256], strides = [1, 1]} : vector<8x512xf32> to vector<8x256xf32>
    %c3_32 = arith.constant 3 : index
    %c0_33 = arith.constant 0 : index
    %c0_34 = arith.constant 0 : index
    %52 = vector.load %arg4[%c3_32, %c0_33, %c0_34] : memref<9x1x256xf32, #tpu.memory_space<vmem>>, vector<1x1x256xf32>
    %53 = vector.shape_cast %52 : vector<1x1x256xf32> to vector<1x256xf32>
    %54 = vector.broadcast %53 : vector<1x256xf32> to vector<8x256xf32>
    %55 = arith.mulf %51, %54 : vector<8x256xf32>
    %56 = vector.extract_strided_slice %35 {offsets = [0, 128], sizes = [8, 256], strides = [1, 1]} : vector<8x512xf32> to vector<8x256xf32>
    %c4 = arith.constant 4 : index
    %c0_35 = arith.constant 0 : index
    %c0_36 = arith.constant 0 : index
    %57 = vector.load %arg4[%c4, %c0_35, %c0_36] : memref<9x1x256xf32, #tpu.memory_space<vmem>>, vector<1x1x256xf32>
    %58 = vector.shape_cast %57 : vector<1x1x256xf32> to vector<1x256xf32>
    %59 = vector.broadcast %58 : vector<1x256xf32> to vector<8x256xf32>
    %60 = arith.mulf %56, %59 : vector<8x256xf32>
    %61 = vector.extract_strided_slice %35 {offsets = [0, 129], sizes = [8, 256], strides = [1, 1]} : vector<8x512xf32> to vector<8x256xf32>
    %c5 = arith.constant 5 : index
    %c0_37 = arith.constant 0 : index
    %c0_38 = arith.constant 0 : index
    %62 = vector.load %arg4[%c5, %c0_37, %c0_38] : memref<9x1x256xf32, #tpu.memory_space<vmem>>, vector<1x1x256xf32>
    %63 = vector.shape_cast %62 : vector<1x1x256xf32> to vector<1x256xf32>
    %64 = vector.broadcast %63 : vector<1x256xf32> to vector<8x256xf32>
    %65 = arith.mulf %61, %64 : vector<8x256xf32>
    %66 = vector.extract_strided_slice %35 {offsets = [0, 143], sizes = [8, 256], strides = [1, 1]} : vector<8x512xf32> to vector<8x256xf32>
    %c6 = arith.constant 6 : index
    %c0_39 = arith.constant 0 : index
    %c0_40 = arith.constant 0 : index
    %67 = vector.load %arg4[%c6, %c0_39, %c0_40] : memref<9x1x256xf32, #tpu.memory_space<vmem>>, vector<1x1x256xf32>
    %68 = vector.shape_cast %67 : vector<1x1x256xf32> to vector<1x256xf32>
    %69 = vector.broadcast %68 : vector<1x256xf32> to vector<8x256xf32>
    %70 = arith.mulf %66, %69 : vector<8x256xf32>
    %71 = vector.extract_strided_slice %35 {offsets = [0, 144], sizes = [8, 256], strides = [1, 1]} : vector<8x512xf32> to vector<8x256xf32>
    %c7 = arith.constant 7 : index
    %c0_41 = arith.constant 0 : index
    %c0_42 = arith.constant 0 : index
    %72 = vector.load %arg4[%c7, %c0_41, %c0_42] : memref<9x1x256xf32, #tpu.memory_space<vmem>>, vector<1x1x256xf32>
    %73 = vector.shape_cast %72 : vector<1x1x256xf32> to vector<1x256xf32>
    %74 = vector.broadcast %73 : vector<1x256xf32> to vector<8x256xf32>
    %75 = arith.mulf %71, %74 : vector<8x256xf32>
    %76 = vector.extract_strided_slice %35 {offsets = [0, 145], sizes = [8, 256], strides = [1, 1]} : vector<8x512xf32> to vector<8x256xf32>
    %c8 = arith.constant 8 : index
    %c0_43 = arith.constant 0 : index
    %c0_44 = arith.constant 0 : index
    %77 = vector.load %arg4[%c8, %c0_43, %c0_44] : memref<9x1x256xf32, #tpu.memory_space<vmem>>, vector<1x1x256xf32>
    %78 = vector.shape_cast %77 : vector<1x1x256xf32> to vector<1x256xf32>
    %79 = vector.broadcast %78 : vector<1x256xf32> to vector<8x256xf32>
    %80 = arith.mulf %76, %79 : vector<8x256xf32>
    %81 = tpu.concatenate %40, %45, %50, %55, %60, %65, %70, %75, %80 in 0 : vector<8x256xf32>, vector<8x256xf32>, vector<8x256xf32>, vector<8x256xf32>, vector<8x256xf32>, vector<8x256xf32>, vector<8x256xf32>, vector<8x256xf32>, vector<8x256xf32> -> vector<72x256xf32>
    %cst_45 = arith.constant 0.000000e+00 : f32
    %82 = vector.broadcast %cst_45 : f32 to vector<8x128xf32>
    %83 = tpu.concatenate %82, %31, %82 in 1 : vector<8x128xf32>, vector<8x256xf32>, vector<8x128xf32> -> vector<8x512xf32>
    %84 = vector.extract_strided_slice %83 {offsets = [0, 111], sizes = [8, 256], strides = [1, 1]} : vector<8x512xf32> to vector<8x256xf32>
    %c0_46 = arith.constant 0 : index
    %c0_47 = arith.constant 0 : index
    %c0_48 = arith.constant 0 : index
    %85 = vector.load %arg4[%c0_46, %c0_47, %c0_48] : memref<9x1x256xf32, #tpu.memory_space<vmem>>, vector<1x1x256xf32>
    %86 = vector.shape_cast %85 : vector<1x1x256xf32> to vector<1x256xf32>
    %87 = vector.broadcast %86 : vector<1x256xf32> to vector<8x256xf32>
    %88 = arith.mulf %84, %87 : vector<8x256xf32>
    %89 = vector.extract_strided_slice %83 {offsets = [0, 112], sizes = [8, 256], strides = [1, 1]} : vector<8x512xf32> to vector<8x256xf32>
    %c1_49 = arith.constant 1 : index
    %c0_50 = arith.constant 0 : index
    %c0_51 = arith.constant 0 : index
    %90 = vector.load %arg4[%c1_49, %c0_50, %c0_51] : memref<9x1x256xf32, #tpu.memory_space<vmem>>, vector<1x1x256xf32>
    %91 = vector.shape_cast %90 : vector<1x1x256xf32> to vector<1x256xf32>
    %92 = vector.broadcast %91 : vector<1x256xf32> to vector<8x256xf32>
    %93 = arith.mulf %89, %92 : vector<8x256xf32>
    %94 = vector.extract_strided_slice %83 {offsets = [0, 113], sizes = [8, 256], strides = [1, 1]} : vector<8x512xf32> to vector<8x256xf32>
    %c2_52 = arith.constant 2 : index
    %c0_53 = arith.constant 0 : index
    %c0_54 = arith.constant 0 : index
    %95 = vector.load %arg4[%c2_52, %c0_53, %c0_54] : memref<9x1x256xf32, #tpu.memory_space<vmem>>, vector<1x1x256xf32>
    %96 = vector.shape_cast %95 : vector<1x1x256xf32> to vector<1x256xf32>
    %97 = vector.broadcast %96 : vector<1x256xf32> to vector<8x256xf32>
    %98 = arith.mulf %94, %97 : vector<8x256xf32>
    %99 = vector.extract_strided_slice %83 {offsets = [0, 127], sizes = [8, 256], strides = [1, 1]} : vector<8x512xf32> to vector<8x256xf32>
    %c3_55 = arith.constant 3 : index
    %c0_56 = arith.constant 0 : index
    %c0_57 = arith.constant 0 : index
    %100 = vector.load %arg4[%c3_55, %c0_56, %c0_57] : memref<9x1x256xf32, #tpu.memory_space<vmem>>, vector<1x1x256xf32>
    %101 = vector.shape_cast %100 : vector<1x1x256xf32> to vector<1x256xf32>
    %102 = vector.broadcast %101 : vector<1x256xf32> to vector<8x256xf32>
    %103 = arith.mulf %99, %102 : vector<8x256xf32>
    %104 = vector.extract_strided_slice %83 {offsets = [0, 128], sizes = [8, 256], strides = [1, 1]} : vector<8x512xf32> to vector<8x256xf32>
    %c4_58 = arith.constant 4 : index
    %c0_59 = arith.constant 0 : index
    %c0_60 = arith.constant 0 : index
    %105 = vector.load %arg4[%c4_58, %c0_59, %c0_60] : memref<9x1x256xf32, #tpu.memory_space<vmem>>, vector<1x1x256xf32>
    %106 = vector.shape_cast %105 : vector<1x1x256xf32> to vector<1x256xf32>
    %107 = vector.broadcast %106 : vector<1x256xf32> to vector<8x256xf32>
    %108 = arith.mulf %104, %107 : vector<8x256xf32>
    %109 = vector.extract_strided_slice %83 {offsets = [0, 129], sizes = [8, 256], strides = [1, 1]} : vector<8x512xf32> to vector<8x256xf32>
    %c5_61 = arith.constant 5 : index
    %c0_62 = arith.constant 0 : index
    %c0_63 = arith.constant 0 : index
    %110 = vector.load %arg4[%c5_61, %c0_62, %c0_63] : memref<9x1x256xf32, #tpu.memory_space<vmem>>, vector<1x1x256xf32>
    %111 = vector.shape_cast %110 : vector<1x1x256xf32> to vector<1x256xf32>
    %112 = vector.broadcast %111 : vector<1x256xf32> to vector<8x256xf32>
    %113 = arith.mulf %109, %112 : vector<8x256xf32>
    %114 = vector.extract_strided_slice %83 {offsets = [0, 143], sizes = [8, 256], strides = [1, 1]} : vector<8x512xf32> to vector<8x256xf32>
    %c6_64 = arith.constant 6 : index
    %c0_65 = arith.constant 0 : index
    %c0_66 = arith.constant 0 : index
    %115 = vector.load %arg4[%c6_64, %c0_65, %c0_66] : memref<9x1x256xf32, #tpu.memory_space<vmem>>, vector<1x1x256xf32>
    %116 = vector.shape_cast %115 : vector<1x1x256xf32> to vector<1x256xf32>
    %117 = vector.broadcast %116 : vector<1x256xf32> to vector<8x256xf32>
    %118 = arith.mulf %114, %117 : vector<8x256xf32>
    %119 = vector.extract_strided_slice %83 {offsets = [0, 144], sizes = [8, 256], strides = [1, 1]} : vector<8x512xf32> to vector<8x256xf32>
    %c7_67 = arith.constant 7 : index
    %c0_68 = arith.constant 0 : index
    %c0_69 = arith.constant 0 : index
    %120 = vector.load %arg4[%c7_67, %c0_68, %c0_69] : memref<9x1x256xf32, #tpu.memory_space<vmem>>, vector<1x1x256xf32>
    %121 = vector.shape_cast %120 : vector<1x1x256xf32> to vector<1x256xf32>
    %122 = vector.broadcast %121 : vector<1x256xf32> to vector<8x256xf32>
    %123 = arith.mulf %119, %122 : vector<8x256xf32>
    %124 = vector.extract_strided_slice %83 {offsets = [0, 145], sizes = [8, 256], strides = [1, 1]} : vector<8x512xf32> to vector<8x256xf32>
    %c8_70 = arith.constant 8 : index
    %c0_71 = arith.constant 0 : index
    %c0_72 = arith.constant 0 : index
    %125 = vector.load %arg4[%c8_70, %c0_71, %c0_72] : memref<9x1x256xf32, #tpu.memory_space<vmem>>, vector<1x1x256xf32>
    %126 = vector.shape_cast %125 : vector<1x1x256xf32> to vector<1x256xf32>
    %127 = vector.broadcast %126 : vector<1x256xf32> to vector<8x256xf32>
    %128 = arith.mulf %124, %127 : vector<8x256xf32>
    %129 = tpu.concatenate %88, %93, %98, %103, %108, %113, %118, %123, %128 in 0 : vector<8x256xf32>, vector<8x256xf32>, vector<8x256xf32>, vector<8x256xf32>, vector<8x256xf32>, vector<8x256xf32>, vector<8x256xf32>, vector<8x256xf32>, vector<8x256xf32> -> vector<72x256xf32>
    %130 = tpu.concatenate %81, %129 in 0 : vector<72x256xf32>, vector<72x256xf32> -> vector<144x256xf32>
    %c0_73 = arith.constant 0 : index
    %c0_74 = arith.constant 0 : index
    %131 = vector.load %arg7[%c0_73, %c0_74] : memref<8x144xbf16, #tpu.memory_space<vmem>>, vector<8x144xbf16>
    %132 = arith.truncf %130 : vector<144x256xf32> to vector<144x256xbf16>
    %cst_75 = arith.constant dense<0.000000e+00> : vector<8x256xf32>
    %133 = tpu.matmul %131, %132, %cst_75 {dimension_numbers = #tpu.dot_dimension_numbers<[1], [0], [0], [1], [0, 0, 1, 1], [], []>} : vector<8x144xbf16>, vector<144x256xbf16>, vector<8x256xf32> -> vector<8x256xf32>
    %c0_76 = arith.constant 0 : index
    %c0_77 = arith.constant 0 : index
    %134 = vector.load %arg8[%c0_76, %c0_77] : memref<8x1xf32, #tpu.memory_space<vmem>>, vector<8x1xf32>
    %135 = vector.broadcast %134 : vector<8x1xf32> to vector<8x256xf32>
    %136 = arith.addf %133, %135 : vector<8x256xf32>
    %cst_78 = arith.constant 0.000000e+00 : f32
    %137 = vector.broadcast %cst_78 : f32 to vector<8x256xf32>
    %138 = arith.maximumf %136, %137 : vector<8x256xf32>
    %c0_79 = arith.constant 0 : index
    %c0_80 = arith.constant 0 : index
    %139 = vector.load %arg9[%c0_79, %c0_80] : memref<8x72xbf16, #tpu.memory_space<vmem>>, vector<8x72xbf16>
    %cst_81 = arith.constant 0.000000e+00 : f32
    %140 = vector.broadcast %cst_81 : f32 to vector<8x128xf32>
    %141 = tpu.concatenate %140, %138, %140 in 1 : vector<8x128xf32>, vector<8x256xf32>, vector<8x128xf32> -> vector<8x512xf32>
    %142 = vector.extract_strided_slice %141 {offsets = [0, 111], sizes = [8, 256], strides = [1, 1]} : vector<8x512xf32> to vector<8x256xf32>
    %c0_82 = arith.constant 0 : index
    %c0_83 = arith.constant 0 : index
    %c0_84 = arith.constant 0 : index
    %143 = vector.load %arg4[%c0_82, %c0_83, %c0_84] : memref<9x1x256xf32, #tpu.memory_space<vmem>>, vector<1x1x256xf32>
    %144 = vector.shape_cast %143 : vector<1x1x256xf32> to vector<1x256xf32>
    %145 = vector.broadcast %144 : vector<1x256xf32> to vector<8x256xf32>
    %146 = arith.mulf %142, %145 : vector<8x256xf32>
    %147 = vector.extract_strided_slice %141 {offsets = [0, 112], sizes = [8, 256], strides = [1, 1]} : vector<8x512xf32> to vector<8x256xf32>
    %c1_85 = arith.constant 1 : index
    %c0_86 = arith.constant 0 : index
    %c0_87 = arith.constant 0 : index
    %148 = vector.load %arg4[%c1_85, %c0_86, %c0_87] : memref<9x1x256xf32, #tpu.memory_space<vmem>>, vector<1x1x256xf32>
    %149 = vector.shape_cast %148 : vector<1x1x256xf32> to vector<1x256xf32>
    %150 = vector.broadcast %149 : vector<1x256xf32> to vector<8x256xf32>
    %151 = arith.mulf %147, %150 : vector<8x256xf32>
    %152 = vector.extract_strided_slice %141 {offsets = [0, 113], sizes = [8, 256], strides = [1, 1]} : vector<8x512xf32> to vector<8x256xf32>
    %c2_88 = arith.constant 2 : index
    %c0_89 = arith.constant 0 : index
    %c0_90 = arith.constant 0 : index
    %153 = vector.load %arg4[%c2_88, %c0_89, %c0_90] : memref<9x1x256xf32, #tpu.memory_space<vmem>>, vector<1x1x256xf32>
    %154 = vector.shape_cast %153 : vector<1x1x256xf32> to vector<1x256xf32>
    %155 = vector.broadcast %154 : vector<1x256xf32> to vector<8x256xf32>
    %156 = arith.mulf %152, %155 : vector<8x256xf32>
    %157 = vector.extract_strided_slice %141 {offsets = [0, 127], sizes = [8, 256], strides = [1, 1]} : vector<8x512xf32> to vector<8x256xf32>
    %c3_91 = arith.constant 3 : index
    %c0_92 = arith.constant 0 : index
    %c0_93 = arith.constant 0 : index
    %158 = vector.load %arg4[%c3_91, %c0_92, %c0_93] : memref<9x1x256xf32, #tpu.memory_space<vmem>>, vector<1x1x256xf32>
    %159 = vector.shape_cast %158 : vector<1x1x256xf32> to vector<1x256xf32>
    %160 = vector.broadcast %159 : vector<1x256xf32> to vector<8x256xf32>
    %161 = arith.mulf %157, %160 : vector<8x256xf32>
    %162 = vector.extract_strided_slice %141 {offsets = [0, 128], sizes = [8, 256], strides = [1, 1]} : vector<8x512xf32> to vector<8x256xf32>
    %c4_94 = arith.constant 4 : index
    %c0_95 = arith.constant 0 : index
    %c0_96 = arith.constant 0 : index
    %163 = vector.load %arg4[%c4_94, %c0_95, %c0_96] : memref<9x1x256xf32, #tpu.memory_space<vmem>>, vector<1x1x256xf32>
    %164 = vector.shape_cast %163 : vector<1x1x256xf32> to vector<1x256xf32>
    %165 = vector.broadcast %164 : vector<1x256xf32> to vector<8x256xf32>
    %166 = arith.mulf %162, %165 : vector<8x256xf32>
    %167 = vector.extract_strided_slice %141 {offsets = [0, 129], sizes = [8, 256], strides = [1, 1]} : vector<8x512xf32> to vector<8x256xf32>
    %c5_97 = arith.constant 5 : index
    %c0_98 = arith.constant 0 : index
    %c0_99 = arith.constant 0 : index
    %168 = vector.load %arg4[%c5_97, %c0_98, %c0_99] : memref<9x1x256xf32, #tpu.memory_space<vmem>>, vector<1x1x256xf32>
    %169 = vector.shape_cast %168 : vector<1x1x256xf32> to vector<1x256xf32>
    %170 = vector.broadcast %169 : vector<1x256xf32> to vector<8x256xf32>
    %171 = arith.mulf %167, %170 : vector<8x256xf32>
    %172 = vector.extract_strided_slice %141 {offsets = [0, 143], sizes = [8, 256], strides = [1, 1]} : vector<8x512xf32> to vector<8x256xf32>
    %c6_100 = arith.constant 6 : index
    %c0_101 = arith.constant 0 : index
    %c0_102 = arith.constant 0 : index
    %173 = vector.load %arg4[%c6_100, %c0_101, %c0_102] : memref<9x1x256xf32, #tpu.memory_space<vmem>>, vector<1x1x256xf32>
    %174 = vector.shape_cast %173 : vector<1x1x256xf32> to vector<1x256xf32>
    %175 = vector.broadcast %174 : vector<1x256xf32> to vector<8x256xf32>
    %176 = arith.mulf %172, %175 : vector<8x256xf32>
    %177 = vector.extract_strided_slice %141 {offsets = [0, 144], sizes = [8, 256], strides = [1, 1]} : vector<8x512xf32> to vector<8x256xf32>
    %c7_103 = arith.constant 7 : index
    %c0_104 = arith.constant 0 : index
    %c0_105 = arith.constant 0 : index
    %178 = vector.load %arg4[%c7_103, %c0_104, %c0_105] : memref<9x1x256xf32, #tpu.memory_space<vmem>>, vector<1x1x256xf32>
    %179 = vector.shape_cast %178 : vector<1x1x256xf32> to vector<1x256xf32>
    %180 = vector.broadcast %179 : vector<1x256xf32> to vector<8x256xf32>
    %181 = arith.mulf %177, %180 : vector<8x256xf32>
    %182 = vector.extract_strided_slice %141 {offsets = [0, 145], sizes = [8, 256], strides = [1, 1]} : vector<8x512xf32> to vector<8x256xf32>
    %c8_106 = arith.constant 8 : index
    %c0_107 = arith.constant 0 : index
    %c0_108 = arith.constant 0 : index
    %183 = vector.load %arg4[%c8_106, %c0_107, %c0_108] : memref<9x1x256xf32, #tpu.memory_space<vmem>>, vector<1x1x256xf32>
    %184 = vector.shape_cast %183 : vector<1x1x256xf32> to vector<1x256xf32>
    %185 = vector.broadcast %184 : vector<1x256xf32> to vector<8x256xf32>
    %186 = arith.mulf %182, %185 : vector<8x256xf32>
    %187 = tpu.concatenate %146, %151, %156, %161, %166, %171, %176, %181, %186 in 0 : vector<8x256xf32>, vector<8x256xf32>, vector<8x256xf32>, vector<8x256xf32>, vector<8x256xf32>, vector<8x256xf32>, vector<8x256xf32>, vector<8x256xf32>, vector<8x256xf32> -> vector<72x256xf32>
    %188 = arith.truncf %187 : vector<72x256xf32> to vector<72x256xbf16>
    %cst_109 = arith.constant dense<0.000000e+00> : vector<8x256xf32>
    %189 = tpu.matmul %139, %188, %cst_109 {dimension_numbers = #tpu.dot_dimension_numbers<[1], [0], [0], [1], [0, 0, 1, 1], [], []>} : vector<8x72xbf16>, vector<72x256xbf16>, vector<8x256xf32> -> vector<8x256xf32>
    %190 = arith.addf %138, %189 : vector<8x256xf32>
    %c0_110 = arith.constant 0 : index
    %c0_111 = arith.constant 0 : index
    %191 = vector.load %arg10[%c0_110, %c0_111] : memref<8x1xf32, #tpu.memory_space<vmem>>, vector<8x1xf32>
    %192 = vector.broadcast %191 : vector<8x1xf32> to vector<8x256xf32>
    %193 = arith.addf %190, %192 : vector<8x256xf32>
    %cst_112 = arith.constant 0.000000e+00 : f32
    %194 = vector.broadcast %cst_112 : f32 to vector<8x256xf32>
    %195 = arith.maximumf %193, %194 : vector<8x256xf32>
    %c0_113 = arith.constant 0 : index
    %c0_114 = arith.constant 0 : index
    %196 = vector.load %arg11[%c0_113, %c0_114] : memref<4x72xbf16, #tpu.memory_space<vmem>>, vector<4x72xbf16>
    %cst_115 = arith.constant 0.000000e+00 : f32
    %197 = vector.broadcast %cst_115 : f32 to vector<8x128xf32>
    %198 = tpu.concatenate %197, %195, %197 in 1 : vector<8x128xf32>, vector<8x256xf32>, vector<8x128xf32> -> vector<8x512xf32>
    %199 = vector.extract_strided_slice %198 {offsets = [0, 111], sizes = [8, 256], strides = [1, 1]} : vector<8x512xf32> to vector<8x256xf32>
    %c0_116 = arith.constant 0 : index
    %c0_117 = arith.constant 0 : index
    %c0_118 = arith.constant 0 : index
    %200 = vector.load %arg4[%c0_116, %c0_117, %c0_118] : memref<9x1x256xf32, #tpu.memory_space<vmem>>, vector<1x1x256xf32>
    %201 = vector.shape_cast %200 : vector<1x1x256xf32> to vector<1x256xf32>
    %202 = vector.broadcast %201 : vector<1x256xf32> to vector<8x256xf32>
    %203 = arith.mulf %199, %202 : vector<8x256xf32>
    %204 = vector.extract_strided_slice %198 {offsets = [0, 112], sizes = [8, 256], strides = [1, 1]} : vector<8x512xf32> to vector<8x256xf32>
    %c1_119 = arith.constant 1 : index
    %c0_120 = arith.constant 0 : index
    %c0_121 = arith.constant 0 : index
    %205 = vector.load %arg4[%c1_119, %c0_120, %c0_121] : memref<9x1x256xf32, #tpu.memory_space<vmem>>, vector<1x1x256xf32>
    %206 = vector.shape_cast %205 : vector<1x1x256xf32> to vector<1x256xf32>
    %207 = vector.broadcast %206 : vector<1x256xf32> to vector<8x256xf32>
    %208 = arith.mulf %204, %207 : vector<8x256xf32>
    %209 = vector.extract_strided_slice %198 {offsets = [0, 113], sizes = [8, 256], strides = [1, 1]} : vector<8x512xf32> to vector<8x256xf32>
    %c2_122 = arith.constant 2 : index
    %c0_123 = arith.constant 0 : index
    %c0_124 = arith.constant 0 : index
    %210 = vector.load %arg4[%c2_122, %c0_123, %c0_124] : memref<9x1x256xf32, #tpu.memory_space<vmem>>, vector<1x1x256xf32>
    %211 = vector.shape_cast %210 : vector<1x1x256xf32> to vector<1x256xf32>
    %212 = vector.broadcast %211 : vector<1x256xf32> to vector<8x256xf32>
    %213 = arith.mulf %209, %212 : vector<8x256xf32>
    %214 = vector.extract_strided_slice %198 {offsets = [0, 127], sizes = [8, 256], strides = [1, 1]} : vector<8x512xf32> to vector<8x256xf32>
    %c3_125 = arith.constant 3 : index
    %c0_126 = arith.constant 0 : index
    %c0_127 = arith.constant 0 : index
    %215 = vector.load %arg4[%c3_125, %c0_126, %c0_127] : memref<9x1x256xf32, #tpu.memory_space<vmem>>, vector<1x1x256xf32>
    %216 = vector.shape_cast %215 : vector<1x1x256xf32> to vector<1x256xf32>
    %217 = vector.broadcast %216 : vector<1x256xf32> to vector<8x256xf32>
    %218 = arith.mulf %214, %217 : vector<8x256xf32>
    %219 = vector.extract_strided_slice %198 {offsets = [0, 128], sizes = [8, 256], strides = [1, 1]} : vector<8x512xf32> to vector<8x256xf32>
    %c4_128 = arith.constant 4 : index
    %c0_129 = arith.constant 0 : index
    %c0_130 = arith.constant 0 : index
    %220 = vector.load %arg4[%c4_128, %c0_129, %c0_130] : memref<9x1x256xf32, #tpu.memory_space<vmem>>, vector<1x1x256xf32>
    %221 = vector.shape_cast %220 : vector<1x1x256xf32> to vector<1x256xf32>
    %222 = vector.broadcast %221 : vector<1x256xf32> to vector<8x256xf32>
    %223 = arith.mulf %219, %222 : vector<8x256xf32>
    %224 = vector.extract_strided_slice %198 {offsets = [0, 129], sizes = [8, 256], strides = [1, 1]} : vector<8x512xf32> to vector<8x256xf32>
    %c5_131 = arith.constant 5 : index
    %c0_132 = arith.constant 0 : index
    %c0_133 = arith.constant 0 : index
    %225 = vector.load %arg4[%c5_131, %c0_132, %c0_133] : memref<9x1x256xf32, #tpu.memory_space<vmem>>, vector<1x1x256xf32>
    %226 = vector.shape_cast %225 : vector<1x1x256xf32> to vector<1x256xf32>
    %227 = vector.broadcast %226 : vector<1x256xf32> to vector<8x256xf32>
    %228 = arith.mulf %224, %227 : vector<8x256xf32>
    %229 = vector.extract_strided_slice %198 {offsets = [0, 143], sizes = [8, 256], strides = [1, 1]} : vector<8x512xf32> to vector<8x256xf32>
    %c6_134 = arith.constant 6 : index
    %c0_135 = arith.constant 0 : index
    %c0_136 = arith.constant 0 : index
    %230 = vector.load %arg4[%c6_134, %c0_135, %c0_136] : memref<9x1x256xf32, #tpu.memory_space<vmem>>, vector<1x1x256xf32>
    %231 = vector.shape_cast %230 : vector<1x1x256xf32> to vector<1x256xf32>
    %232 = vector.broadcast %231 : vector<1x256xf32> to vector<8x256xf32>
    %233 = arith.mulf %229, %232 : vector<8x256xf32>
    %234 = vector.extract_strided_slice %198 {offsets = [0, 144], sizes = [8, 256], strides = [1, 1]} : vector<8x512xf32> to vector<8x256xf32>
    %c7_137 = arith.constant 7 : index
    %c0_138 = arith.constant 0 : index
    %c0_139 = arith.constant 0 : index
    %235 = vector.load %arg4[%c7_137, %c0_138, %c0_139] : memref<9x1x256xf32, #tpu.memory_space<vmem>>, vector<1x1x256xf32>
    %236 = vector.shape_cast %235 : vector<1x1x256xf32> to vector<1x256xf32>
    %237 = vector.broadcast %236 : vector<1x256xf32> to vector<8x256xf32>
    %238 = arith.mulf %234, %237 : vector<8x256xf32>
    %239 = vector.extract_strided_slice %198 {offsets = [0, 145], sizes = [8, 256], strides = [1, 1]} : vector<8x512xf32> to vector<8x256xf32>
    %c8_140 = arith.constant 8 : index
    %c0_141 = arith.constant 0 : index
    %c0_142 = arith.constant 0 : index
    %240 = vector.load %arg4[%c8_140, %c0_141, %c0_142] : memref<9x1x256xf32, #tpu.memory_space<vmem>>, vector<1x1x256xf32>
    %241 = vector.shape_cast %240 : vector<1x1x256xf32> to vector<1x256xf32>
    %242 = vector.broadcast %241 : vector<1x256xf32> to vector<8x256xf32>
    %243 = arith.mulf %239, %242 : vector<8x256xf32>
    %244 = tpu.concatenate %203, %208, %213, %218, %223, %228, %233, %238, %243 in 0 : vector<8x256xf32>, vector<8x256xf32>, vector<8x256xf32>, vector<8x256xf32>, vector<8x256xf32>, vector<8x256xf32>, vector<8x256xf32>, vector<8x256xf32>, vector<8x256xf32> -> vector<72x256xf32>
    %245 = arith.truncf %244 : vector<72x256xf32> to vector<72x256xbf16>
    %cst_143 = arith.constant dense<0.000000e+00> : vector<4x256xf32>
    %246 = tpu.matmul %196, %245, %cst_143 {dimension_numbers = #tpu.dot_dimension_numbers<[1], [0], [0], [1], [0, 0, 1, 1], [], []>} : vector<4x72xbf16>, vector<72x256xbf16>, vector<4x256xf32> -> vector<4x256xf32>
    %c0_144 = arith.constant 0 : index
    %c0_145 = arith.constant 0 : index
    %247 = vector.load %arg12[%c0_144, %c0_145] : memref<4x1xf32, #tpu.memory_space<vmem>>, vector<4x1xf32>
    %248 = vector.broadcast %247 : vector<4x1xf32> to vector<4x256xf32>
    %249 = arith.addf %246, %248 : vector<4x256xf32>
    %cst_146 = arith.constant 0.000000e+00 : f32
    %250 = vector.broadcast %cst_146 : f32 to vector<4x256xf32>
    %251 = arith.maximumf %249, %250 : vector<4x256xf32>
    %c0_147 = arith.constant 0 : index
    %c0_148 = arith.constant 0 : index
    %c0_149 = arith.constant 0 : index
    %252 = vector.load %arg13[%c0_147, %c0_148, %c0_149] : memref<1x4x256xf32, #tpu.memory_space<vmem>>, vector<1x4x256xf32>
    %253 = vector.shape_cast %252 : vector<1x4x256xf32> to vector<4x256xf32>
    %254 = vector.shape_cast %251 : vector<4x256xf32> to vector<1x4x256xf32>
    tpu.vector_store %arg13[%c0_147, %c0_148, %c0_149], %254 {strides = array<i32>} : memref<1x4x256xf32, #tpu.memory_space<vmem>>, vector<1x4x256xf32>,
    return
  }
  func.func @transform_0(%arg0: i32) -> (i32, i32, i32) {
    %c0_i32 = arith.constant 0 : i32
    %c0_i32_0 = arith.constant 0 : i32
    %c0_i32_1 = arith.constant 0 : i32
    return %arg0, %c0_i32, %c0_i32_0 : i32, i32, i32
  }
  func.func @transform_1(%arg0: i32) -> (i32, i32, i32) {
    %c0_i32 = arith.constant 0 : i32
    %c0_i32_0 = arith.constant 0 : i32
    %c0_i32_1 = arith.constant 0 : i32
    return %arg0, %c0_i32, %c0_i32_0 : i32, i32, i32
  }
  func.func @transform_2(%arg0: i32) -> (i32, i32, i32) {
    %c0_i32 = arith.constant 0 : i32
    %c0_i32_0 = arith.constant 0 : i32
    %c0_i32_1 = arith.constant 0 : i32
    %c0_i32_2 = arith.constant 0 : i32
    return %c0_i32, %c0_i32_0, %c0_i32_1 : i32, i32, i32
  }
  func.func @transform_3(%arg0: i32) -> (i32, i32, i32) {
    %c0_i32 = arith.constant 0 : i32
    %c0_i32_0 = arith.constant 0 : i32
    %c0_i32_1 = arith.constant 0 : i32
    %c0_i32_2 = arith.constant 0 : i32
    return %c0_i32, %c0_i32_0, %c0_i32_1 : i32, i32, i32
  }
  func.func @transform_4(%arg0: i32) -> (i32, i32) {
    %c0_i32 = arith.constant 0 : i32
    %c0_i32_0 = arith.constant 0 : i32
    %c0_i32_1 = arith.constant 0 : i32
    return %c0_i32, %c0_i32_0 : i32, i32
  }
  func.func @transform_5(%arg0: i32) -> (i32, i32) {
    %c0_i32 = arith.constant 0 : i32
    %c0_i32_0 = arith.constant 0 : i32
    %c0_i32_1 = arith.constant 0 : i32
    return %c0_i32, %c0_i32_0 : i32, i32
  }
  func.func @transform_6(%arg0: i32) -> (i32, i32) {
    %c0_i32 = arith.constant 0 : i32
    %c0_i32_0 = arith.constant 0 : i32
    %c0_i32_1 = arith.constant 0 : i32
    return %c0_i32, %c0_i32_0 : i32, i32
  }
  func.func @transform_7(%arg0: i32) -> (i32, i32) {
    %c0_i32 = arith.constant 0 : i32
    %c0_i32_0 = arith.constant 0 : i32
    %c0_i32_1 = arith.constant 0 : i32
    return %c0_i32, %c0_i32_0 : i32, i32
  }
  func.func @transform_8(%arg0: i32) -> (i32, i32) {
    %c0_i32 = arith.constant 0 : i32
    %c0_i32_0 = arith.constant 0 : i32
    %c0_i32_1 = arith.constant 0 : i32
    return %c0_i32, %c0_i32_0 : i32, i32
  }
  func.func @transform_9(%arg0: i32) -> (i32, i32) {
    %c0_i32 = arith.constant 0 : i32
    %c0_i32_0 = arith.constant 0 : i32
    %c0_i32_1 = arith.constant 0 : i32
    return %c0_i32, %c0_i32_0 : i32, i32
  }
  func.func @transform_10(%arg0: i32) -> (i32, i32) {
    %c0_i32 = arith.constant 0 : i32
    %c0_i32_0 = arith.constant 0 : i32
    %c0_i32_1 = arith.constant 0 : i32
    return %c0_i32, %c0_i32_0 : i32, i32
  }
  func.func @transform_11(%arg0: i32) -> (i32, i32) {
    %c0_i32 = arith.constant 0 : i32
    %c0_i32_0 = arith.constant 0 : i32
    %c0_i32_1 = arith.constant 0 : i32
    return %c0_i32, %c0_i32_0 : i32, i32
  }
  func.func @transform_12(%arg0: i32) -> (i32, i32, i32) {
    %c0_i32 = arith.constant 0 : i32
    %c0_i32_0 = arith.constant 0 : i32
    %c0_i32_1 = arith.constant 0 : i32
    return %arg0, %c0_i32, %c0_i32_0 : i32, i32, i32
  }
}

</mosaic_0001>

<llo_original>
// kernel: dec_block_forward.1
$region0: #{dec_block_forward.1}
  #allocation0 [shape = 'u32[]', space=smem, size = 0x4, offset = 0x4, fixed_abs, tag = 'smem constant byte address 0x4 - core index']
  #allocation1 [shape = 'u32[72,128]{1,0:T(1,128)}', space=vmem, size = 0x9000, scoped, tag = 'internal scratch']
  %s0 = inlined_call_operand.vmem [shape: f32[2,8,256], index: 0, kind: input, shape index: {}]
  %s1 = inlined_call_operand.vmem [shape: f32[2,8,64], index: 1, kind: input, shape index: {}]
  %s2 = inlined_call_operand.vmem [shape: bf16[4,64,256], index: 2, kind: input, shape index: {}]
  %s3 = inlined_call_operand.vmem [shape: f32[9,1,256], index: 3, kind: input, shape index: {}]
  %s4 = inlined_call_operand.vmem [shape: bf16[32,8], index: 4, kind: input, shape index: {}]
  %s5 = inlined_call_operand.vmem [shape: f32[8,1], index: 5, kind: input, shape index: {}]
  %s6 = inlined_call_operand.vmem [shape: bf16[8,144], index: 6, kind: input, shape index: {}]
  %s7 = inlined_call_operand.vmem [shape: f32[8,1], index: 7, kind: input, shape index: {}]
  %s8 = inlined_call_operand.vmem [shape: bf16[8,72], index: 8, kind: input, shape index: {}]
  %s9 = inlined_call_operand.vmem [shape: f32[8,1], index: 9, kind: input, shape index: {}]
  %s10 = inlined_call_operand.vmem [shape: bf16[4,72], index: 10, kind: input, shape index: {}]
  %s11 = inlined_call_operand.vmem [shape: f32[4,1], index: 11, kind: input, shape index: {}]
  %s12 = inlined_call_operand.vmem [shape: f32[2,4,256], index: 12, kind: output, shape index: {}]
  %s13 = sld [smem:[#allocation0]]
  $region81: #{dec_block_forward.1} parent=0
    _
  %s15 = ssub.s32 1, %s13
  %s16 = scalar_select 0, %s15, %s13
  loop: start=0, step=1, limit=4
  $region2: #{dec_block_forward.1} parent=0 // loop_pre_header
    _
  $region3: #{dec_block_forward.1} parent=0 // loop_header
    %s18 = sphi 0, %s22
    %p19 = scmp.ge.s32.totalorder %s18, 4
    %s28 = sphi 0, %s30
    %s31 = sphi 0, %s28
    %s32 = sphi 0, %s31
    %s48 = sphi 0, %s32
    %s54 = sphi 0, %s56
    %s57 = sphi 0, %s54
    %s58 = sphi 0, %s57
    %s74 = sphi 0, %s58
    %s78 = sphi 0, %s78
    %s80 = sphi 0, %s78
    %s81 = sphi 0, %s80
    %s95 = sphi 0, %s81
    %s99 = sphi 0, %s99
    %s101 = sphi 0, %s99
    %s102 = sphi 0, %s101
    %s116 = sphi 0, %s102
    %s120 = sphi 0, %s120
    %s122 = sphi 0, %s120
    %s123 = sphi 0, %s122
    %s137 = sphi 0, %s123
    %s141 = sphi 0, %s141
    %s143 = sphi 0, %s141
    %s144 = sphi 0, %s143
    %s158 = sphi 0, %s144
    %s162 = sphi 0, %s162
    %s164 = sphi 0, %s162
    %s165 = sphi 0, %s164
    %s179 = sphi 0, %s165
    %s183 = sphi 0, %s183
    %s185 = sphi 0, %s183
    %s186 = sphi 0, %s185
    %s200 = sphi 0, %s186
    %s204 = sphi 0, %s204
    %s206 = sphi 0, %s204
    %s207 = sphi 0, %s206
    %s221 = sphi 0, %s207
    %s225 = sphi 0, %s225
    %s227 = sphi 0, %s225
    %s228 = sphi 0, %s227
    %s242 = sphi 0, %s228
    %s246 = sphi 0, %s246
    %s248 = sphi 0, %s246
    %s249 = sphi 0, %s248
    %s263 = sphi 0, %s249
    %s267 = sphi 0, %s267
    %s269 = sphi 0, %s267
    %s270 = sphi 0, %s269
    %s284 = sphi 0, %s270
    %s290 = sphi 0, %s292
    %s293 = sphi 0, %s290
    %s294 = sphi 0, %s293
    %s310 = sphi 0, %s294
  $region4: #{dec_block_forward.1} parent=0 // loop_header_branch
    %21 = sbr.rel (%p19) target = $region8
  $region5: #{dec_block_forward.1} parent=0 // loop_body
    %s23 = ssub.s32 %s18, 1
    %s24 = ssub.s32 %s18, 2
    %s25 = sadd.s32 %s18, 1
    %s26 = ssub.s32 %s18, %s25
    %p27 = scmp.eq.s32.totalorder %s26, 0
    %s29 = sadd.s32 %s28, 1
    %s30 = scalar_select %p27, %s28, %s29
    %p33 = pneg %p27
    %p34 = scmp.eq.s32.totalorder %s18, 1
    %p35 = por %p33, %p34
    %p36 = scmp.ne.s32.totalorder %s28, %s31
    %p37 = scmp.eq.s32.totalorder %s18, 0
    %p38 = por %p36, %p37
    %p39 = scmp.ne.s32.totalorder %s28, %s31
    %p40 = scmp.eq.s32.totalorder %s23, 1
    %p41 = por %p39, %p40
    %p42 = scmp.ne.s32.totalorder %s31, %s32
    %p43 = scmp.eq.s32.totalorder %s23, 0
    %p44 = por %p42, %p43
    %p45 = scmp.ne.s32.totalorder %s31, %s32
    %p46 = scmp.eq.s32.totalorder %s24, 1
    %p47 = por %p45, %p46
    %p49 = scmp.ne.s32.totalorder %s32, %s48
    %p50 = scmp.eq.s32.totalorder %s24, 0
    %p51 = por %p49, %p50
    %s52 = ssub.s32 %s18, %s25
    %p53 = scmp.eq.s32.totalorder %s52, 0
    %s55 = sadd.s32 %s54, 1
    %s56 = scalar_select %p53, %s54, %s55
    %p59 = pneg %p53
    %p60 = scmp.eq.s32.totalorder %s18, 1
    %p61 = por %p59, %p60
    %p62 = scmp.ne.s32.totalorder %s54, %s57
    %p63 = scmp.eq.s32.totalorder %s18, 0
    %p64 = por %p62, %p63
    %p65 = scmp.ne.s32.totalorder %s54, %s57
    %p66 = scmp.eq.s32.totalorder %s23, 1
    %p67 = por %p65, %p66
    %p68 = scmp.ne.s32.totalorder %s57, %s58
    %p69 = scmp.eq.s32.totalorder %s23, 0
    %p70 = por %p68, %p69
    %p71 = scmp.ne.s32.totalorder %s57, %s58
    %p72 = scmp.eq.s32.totalorder %s24, 1
    %p73 = por %p71, %p72
    %p75 = scmp.ne.s32.totalorder %s58, %s74
    %p76 = scmp.eq.s32.totalorder %s24, 0
    %p77 = por %p75, %p76
    %s79 = sadd.s32 %s78, 1
    %p82 = scmp.eq.s32.totalorder %s18, 1
    %p83 = scmp.ne.s32.totalorder %s78, %s80
    %p84 = scmp.eq.s32.totalorder %s18, 0
    %p85 = por %p83, %p84
    %p86 = scmp.ne.s32.totalorder %s78, %s80
    %p87 = scmp.eq.s32.totalorder %s23, 1
    %p88 = por %p86, %p87
    %p89 = scmp.ne.s32.totalorder %s80, %s81
    %p90 = scmp.eq.s32.totalorder %s23, 0
    %p91 = por %p89, %p90
    %p92 = scmp.ne.s32.totalorder %s80, %s81
    %p93 = scmp.eq.s32.totalorder %s24, 1
    %p94 = por %p92, %p93
    %p96 = scmp.ne.s32.totalorder %s81, %s95
    %p97 = scmp.eq.s32.totalorder %s24, 0
    %p98 = por %p96, %p97
    %s100 = sadd.s32 %s99, 1
    %p103 = scmp.eq.s32.totalorder %s18, 1
    %p104 = scmp.ne.s32.totalorder %s99, %s101
    %p105 = scmp.eq.s32.totalorder %s18, 0
    %p106 = por %p104, %p105
    %p107 = scmp.ne.s32.totalorder %s99, %s101
    %p108 = scmp.eq.s32.totalorder %s23, 1
    %p109 = por %p107, %p108
    %p110 = scmp.ne.s32.totalorder %s101, %s102
    %p111 = scmp.eq.s32.totalorder %s23, 0
    %p112 = por %p110, %p111
    %p113 = scmp.ne.s32.totalorder %s101, %s102
    %p114 = scmp.eq.s32.totalorder %s24, 1
    %p115 = por %p113, %p114
    %p117 = scmp.ne.s32.totalorder %s102, %s116
    %p118 = scmp.eq.s32.totalorder %s24, 0
    %p119 = por %p117, %p118
    %s121 = sadd.s32 %s120, 1
    %p124 = scmp.eq.s32.totalorder %s18, 1
    %p125 = scmp.ne.s32.totalorder %s120, %s122
    %p126 = scmp.eq.s32.totalorder %s18, 0
    %p127 = por %p125, %p126
    %p128 = scmp.ne.s32.totalorder %s120, %s122
    %p129 = scmp.eq.s32.totalorder %s23, 1
    %p130 = por %p128, %p129
    %p131 = scmp.ne.s32.totalorder %s122, %s123
    %p132 = scmp.eq.s32.totalorder %s23, 0
    %p133 = por %p131, %p132
    %p134 = scmp.ne.s32.totalorder %s122, %s123
    %p135 = scmp.eq.s32.totalorder %s24, 1
    %p136 = por %p134, %p135
    %p138 = scmp.ne.s32.totalorder %s123, %s137
    %p139 = scmp.eq.s32.totalorder %s24, 0
    %p140 = por %p138, %p139
    %s142 = sadd.s32 %s141, 1
    %p145 = scmp.eq.s32.totalorder %s18, 1
    %p146 = scmp.ne.s32.totalorder %s141, %s143
    %p147 = scmp.eq.s32.totalorder %s18, 0
    %p148 = por %p146, %p147
    %p149 = scmp.ne.s32.totalorder %s141, %s143
    %p150 = scmp.eq.s32.totalorder %s23, 1
    %p151 = por %p149, %p150
    %p152 = scmp.ne.s32.totalorder %s143, %s144
    %p153 = scmp.eq.s32.totalorder %s23, 0
    %p154 = por %p152, %p153
    %p155 = scmp.ne.s32.totalorder %s143, %s144
    %p156 = scmp.eq.s32.totalorder %s24, 1
    %p157 = por %p155, %p156
    %p159 = scmp.ne.s32.totalorder %s144, %s158
    %p160 = scmp.eq.s32.totalorder %s24, 0
    %p161 = por %p159, %p160
    %s163 = sadd.s32 %s162, 1
    %p166 = scmp.eq.s32.totalorder %s18, 1
    %p167 = scmp.ne.s32.totalorder %s162, %s164
    %p168 = scmp.eq.s32.totalorder %s18, 0
    %p169 = por %p167, %p168
    %p170 = scmp.ne.s32.totalorder %s162, %s164
    %p171 = scmp.eq.s32.totalorder %s23, 1
    %p172 = por %p170, %p171
    %p173 = scmp.ne.s32.totalorder %s164, %s165
    %p174 = scmp.eq.s32.totalorder %s23, 0
    %p175 = por %p173, %p174
    %p176 = scmp.ne.s32.totalorder %s164, %s165
    %p177 = scmp.eq.s32.totalorder %s24, 1
    %p178 = por %p176, %p177
    %p180 = scmp.ne.s32.totalorder %s165, %s179
    %p181 = scmp.eq.s32.totalorder %s24, 0
    %p182 = por %p180, %p181
    %s184 = sadd.s32 %s183, 1
    %p187 = scmp.eq.s32.totalorder %s18, 1
    %p188 = scmp.ne.s32.totalorder %s183, %s185
    %p189 = scmp.eq.s32.totalorder %s18, 0
    %p190 = por %p188, %p189
    %p191 = scmp.ne.s32.totalorder %s183, %s185
    %p192 = scmp.eq.s32.totalorder %s23, 1
    %p193 = por %p191, %p192
    %p194 = scmp.ne.s32.totalorder %s185, %s186
    %p195 = scmp.eq.s32.totalorder %s23, 0
    %p196 = por %p194, %p195
    %p197 = scmp.ne.s32.totalorder %s185, %s186
    %p198 = scmp.eq.s32.totalorder %s24, 1
    %p199 = por %p197, %p198
    %p201 = scmp.ne.s32.totalorder %s186, %s200
    %p202 = scmp.eq.s32.totalorder %s24, 0
    %p203 = por %p201, %p202
    %s205 = sadd.s32 %s204, 1
    %p208 = scmp.eq.s32.totalorder %s18, 1
    %p209 = scmp.ne.s32.totalorder %s204, %s206
    %p210 = scmp.eq.s32.totalorder %s18, 0
    %p211 = por %p209, %p210
    %p212 = scmp.ne.s32.totalorder %s204, %s206
    %p213 = scmp.eq.s32.totalorder %s23, 1
    %p214 = por %p212, %p213
    %p215 = scmp.ne.s32.totalorder %s206, %s207
    %p216 = scmp.eq.s32.totalorder %s23, 0
    %p217 = por %p215, %p216
    %p218 = scmp.ne.s32.totalorder %s206, %s207
    %p219 = scmp.eq.s32.totalorder %s24, 1
    %p220 = por %p218, %p219
    %p222 = scmp.ne.s32.totalorder %s207, %s221
    %p223 = scmp.eq.s32.totalorder %s24, 0
    %p224 = por %p222, %p223
    %s226 = sadd.s32 %s225, 1
    %p229 = scmp.eq.s32.totalorder %s18, 1
    %p230 = scmp.ne.s32.totalorder %s225, %s227
    %p231 = scmp.eq.s32.totalorder %s18, 0
    %p232 = por %p230, %p231
    %p233 = scmp.ne.s32.totalorder %s225, %s227
    %p234 = scmp.eq.s32.totalorder %s23, 1
    %p235 = por %p233, %p234
    %p236 = scmp.ne.s32.totalorder %s227, %s228
    %p237 = scmp.eq.s32.totalorder %s23, 0
    %p238 = por %p236, %p237
    %p239 = scmp.ne.s32.totalorder %s227, %s228
    %p240 = scmp.eq.s32.totalorder %s24, 1
    %p241 = por %p239, %p240
    %p243 = scmp.ne.s32.totalorder %s228, %s242
    %p244 = scmp.eq.s32.totalorder %s24, 0
    %p245 = por %p243, %p244
    %s247 = sadd.s32 %s246, 1
    %p250 = scmp.eq.s32.totalorder %s18, 1
    %p251 = scmp.ne.s32.totalorder %s246, %s248
    %p252 = scmp.eq.s32.totalorder %s18, 0
    %p253 = por %p251, %p252
    %p254 = scmp.ne.s32.totalorder %s246, %s248
    %p255 = scmp.eq.s32.totalorder %s23, 1
    %p256 = por %p254, %p255
    %p257 = scmp.ne.s32.totalorder %s248, %s249
    %p258 = scmp.eq.s32.totalorder %s23, 0
    %p259 = por %p257, %p258
    %p260 = scmp.ne.s32.totalorder %s248, %s249
    %p261 = scmp.eq.s32.totalorder %s24, 1
    %p262 = por %p260, %p261
    %p264 = scmp.ne.s32.totalorder %s249, %s263
    %p265 = scmp.eq.s32.totalorder %s24, 0
    %p266 = por %p264, %p265
    %s268 = sadd.s32 %s267, 1
    %p271 = scmp.eq.s32.totalorder %s18, 1
    %p272 = scmp.ne.s32.totalorder %s267, %s269
    %p273 = scmp.eq.s32.totalorder %s18, 0
    %p274 = por %p272, %p273
    %p275 = scmp.ne.s32.totalorder %s267, %s269
    %p276 = scmp.eq.s32.totalorder %s23, 1
    %p277 = por %p275, %p276
    %p278 = scmp.ne.s32.totalorder %s269, %s270
    %p279 = scmp.eq.s32.totalorder %s23, 0
    %p280 = por %p278, %p279
    %p281 = scmp.ne.s32.totalorder %s269, %s270
    %p282 = scmp.eq.s32.totalorder %s24, 1
    %p283 = por %p281, %p282
    %p285 = scmp.ne.s32.totalorder %s270, %s284
    %p286 = scmp.eq.s32.totalorder %s24, 0
    %p287 = por %p285, %p286
    %s288 = ssub.s32 %s18, %s25
    %p289 = scmp.eq.s32.totalorder %s288, 0
    %s291 = sadd.s32 %s290, 1
    %s292 = scalar_select %p289, %s290, %s291
    %p295 = pneg %p289
    %p296 = scmp.eq.s32.totalorder %s18, 1
    %p297 = por %p295, %p296
    %p298 = scmp.ne.s32.totalorder %s290, %s293
    %p299 = scmp.eq.s32.totalorder %s18, 0
    %p300 = por %p298, %p299
    %p301 = scmp.ne.s32.totalorder %s290, %s293
    %p302 = scmp.eq.s32.totalorder %s23, 1
    %p303 = por %p301, %p302
    %p304 = scmp.ne.s32.totalorder %s293, %s294
    %p305 = scmp.eq.s32.totalorder %s23, 0
    %p306 = por %p304, %p305
    %p307 = scmp.ne.s32.totalorder %s293, %s294
    %p308 = scmp.eq.s32.totalorder %s24, 1
    %p309 = por %p307, %p308
    %p311 = scmp.ne.s32.totalorder %s294, %s310
    %p312 = scmp.eq.s32.totalorder %s24, 0
    %p313 = por %p311, %p312
    %p314 = scmp.le.s32.totalorder 1, %s18
    %p315 = scmp.lt.s32.totalorder %s18, 3
    %p316 = pnand %p314, %p315
    %p317 = pneg %p316
    // Predicated region
    $region9: #{dec_block_forward.1} parent=5 // pred_check
      _
    $region10: #{dec_block_forward.1} parent=5 // pred_check_branch
      %319 = sbr.rel (%p316) target = $region12
    $region11: #{dec_block_forward.1} parent=5 // pred_region
      %s320 = ssub.s32 %s18, 1
      // Predicated region
      $region13: #{dec_block_forward.1} parent=11 // pred_check
        %p321 = pneg %p91
      $region14: #{dec_block_forward.1} parent=11 // pred_check_branch
        %323 = sbr.rel (%p321) target = $region16
      $region15: #{dec_block_forward.1} parent=11 // pred_region
        _
      $region16: #{dec_block_forward.1} parent=11 // pred_fallthru
        _
      // Predicated region
      $region17: #{dec_block_forward.1} parent=11 // pred_check
        %p324 = pneg %p112
      $region18: #{dec_block_forward.1} parent=11 // pred_check_branch
        %326 = sbr.rel (%p324) target = $region20
      $region19: #{dec_block_forward.1} parent=11 // pred_region
        _
      $region20: #{dec_block_forward.1} parent=11 // pred_fallthru
        _
      // Predicated region
      $region21: #{dec_block_forward.1} parent=11 // pred_check
        %p327 = pneg %p133
      $region22: #{dec_block_forward.1} parent=11 // pred_check_branch
        %329 = sbr.rel (%p327) target = $region24
      $region23: #{dec_block_forward.1} parent=11 // pred_region
        _
      $region24: #{dec_block_forward.1} parent=11 // pred_fallthru
        _
      // Predicated region
      $region25: #{dec_block_forward.1} parent=11 // pred_check
        %p330 = pneg %p154
      $region26: #{dec_block_forward.1} parent=11 // pred_check_branch
        %332 = sbr.rel (%p330) target = $region28
      $region27: #{dec_block_forward.1} parent=11 // pred_region
        _
      $region28: #{dec_block_forward.1} parent=11 // pred_fallthru
        _
      // Predicated region
      $region29: #{dec_block_forward.1} parent=11 // pred_check
        %p333 = pneg %p175
      $region30: #{dec_block_forward.1} parent=11 // pred_check_branch
        %335 = sbr.rel (%p333) target = $region32
      $region31: #{dec_block_forward.1} parent=11 // pred_region
        _
      $region32: #{dec_block_forward.1} parent=11 // pred_fallthru
        _
      // Predicated region
      $region33: #{dec_block_forward.1} parent=11 // pred_check
        %p336 = pneg %p196
      $region34: #{dec_block_forward.1} parent=11 // pred_check_branch
        %338 = sbr.rel (%p336) target = $region36
      $region35: #{dec_block_forward.1} parent=11 // pred_region
        _
      $region36: #{dec_block_forward.1} parent=11 // pred_fallthru
        _
      // Predicated region
      $region37: #{dec_block_forward.1} parent=11 // pred_check
        %p339 = pneg %p217
      $region38: #{dec_block_forward.1} parent=11 // pred_check_branch
        %341 = sbr.rel (%p339) target = $region40
      $region39: #{dec_block_forward.1} parent=11 // pred_region
        _
      $region40: #{dec_block_forward.1} parent=11 // pred_fallthru
        _
      // Predicated region
      $region41: #{dec_block_forward.1} parent=11 // pred_check
        %p342 = pneg %p238
      $region42: #{dec_block_forward.1} parent=11 // pred_check_branch
        %344 = sbr.rel (%p342) target = $region44
      $region43: #{dec_block_forward.1} parent=11 // pred_region
        _
      $region44: #{dec_block_forward.1} parent=11 // pred_fallthru
        _
      // Predicated region
      $region45: #{dec_block_forward.1} parent=11 // pred_check
        %p345 = pneg %p259
      $region46: #{dec_block_forward.1} parent=11 // pred_check_branch
        %347 = sbr.rel (%p345) target = $region48
      $region47: #{dec_block_forward.1} parent=11 // pred_region
        _
      $region48: #{dec_block_forward.1} parent=11 // pred_fallthru
        _
      // Predicated region
      $region49: #{dec_block_forward.1} parent=11 // pred_check
        %p348 = pneg %p280
      $region50: #{dec_block_forward.1} parent=11 // pred_check_branch
        %350 = sbr.rel (%p348) target = $region52
      $region51: #{dec_block_forward.1} parent=11 // pred_region
        _
      $region52: #{dec_block_forward.1} parent=11 // pred_fallthru
        _
    $region12: #{dec_block_forward.1} parent=5 // pred_fallthru
      _
    %p351 = scmp.lt.s32.totalorder %s18, 2
    // Predicated region
    $region53: #{dec_block_forward.1} parent=5 // pred_check
      %p352 = pneg %p351
    $region54: #{dec_block_forward.1} parent=5 // pred_check_branch
      %354 = sbr.rel (%p352) target = $region56
    $region55: #{dec_block_forward.1} parent=5 // pred_region
      // Predicated region
      $region57: #{dec_block_forward.1} parent=55 // pred_check
        %p355 = pneg %p38
      $region58: #{dec_block_forward.1} parent=55 // pred_check_branch
        %357 = sbr.rel (%p355) target = $region60
      $region59: #{dec_block_forward.1} parent=55 // pred_region
        %p358 = scmp.lt.s32.totalorder %s18, 1
        %s359 = scalar_select %p358, %s18, 1
        %s360 = smul.addr %s359, 2
        %s361 = smul.addr %s360, 8
        %s362 = scalar_lea.vmem %s0, %s361
      $region60: #{dec_block_forward.1} parent=55 // pred_fallthru
        _
      // Predicated region
      $region61: #{dec_block_forward.1} parent=55 // pred_check
        %p363 = pneg %p64
      $region62: #{dec_block_forward.1} parent=55 // pred_check_branch
        %365 = sbr.rel (%p363) target = $region64
      $region63: #{dec_block_forward.1} parent=55 // pred_region
        %p366 = scmp.lt.s32.totalorder %s18, 1
        %s367 = scalar_select %p366, %s18, 1
        %s368 = smul.addr %s367, 8
        %s369 = scalar_lea.vmem %s1, %s368
      $region64: #{dec_block_forward.1} parent=55 // pred_fallthru
        _
    $region56: #{dec_block_forward.1} parent=5 // pred_fallthru
      _
    %p370 = scmp.le.s32.totalorder 1, %s18
    %p371 = scmp.lt.s32.totalorder %s18, 3
    %p372 = pnand %p370, %p371
    %p373 = pneg %p372
    // Predicated region
    $region65: #{dec_block_forward.1} parent=5 // pred_check
      _
    $region66: #{dec_block_forward.1} parent=5 // pred_check_branch
      %375 = sbr.rel (%p372) target = $region68
    $region67: #{dec_block_forward.1} parent=5 // pred_region
      %s376 = ssub.s32 %s18, 1
      %p377 = scmp.lt.s32.totalorder %s23, 1
      %s378 = scalar_select %p377, %s23, 1
      %s379 = smul.addr %s378, 2
      %s380 = smul.addr %s379, 8
      %s381 = scalar_lea.vmem %s0, %s380
      %p382 = pneg %p44
      %p383 = pneg %p41
      %p384 = scmp.lt.s32.totalorder %s23, 1
      %s385 = scalar_select %p384, %s23, 1
      %s386 = smul.addr %s385, 8
      %s387 = scalar_lea.vmem %s1, %s386
      %p388 = pneg %p70
      %p389 = pneg %p67
      %p390 = pneg %p91
      %p391 = pneg %p88
      %p392 = pneg %p112
      %p393 = pneg %p109
      %p394 = pneg %p133
      %p395 = pneg %p130
      %p396 = pneg %p154
      %p397 = pneg %p151
      %p398 = pneg %p175
      %p399 = pneg %p172
      %p400 = pneg %p196
      %p401 = pneg %p193
      %p402 = pneg %p217
      %p403 = pneg %p214
      %p404 = pneg %p238
      %p405 = pneg %p235
      %p406 = pneg %p259
      %p407 = pneg %p256
      %p408 = pneg %p280
      %p409 = pneg %p277
      %p410 = pneg %p306
      %p411 = pneg %p303
      %p412 = scmp.lt.s32.totalorder %s23, 1
      %s413 = scalar_select %p412, %s23, 1
      %s414 = smul.addr %s413, 2
      %s415 = smul.addr %s414, 4
      %s416 = scalar_lea.vmem %s12, %s415
      %p417 = scmp.lt.s32.totalorder %s23, 1
      %s418 = scalar_select %p417, %s23, 1
      %s419 = smul.addr %s418, 2
      %s420 = smul.addr %s419, 8
      %s421 = scalar_lea.vmem %s0, %s420
      %p422 = scmp.lt.s32.totalorder %s23, 1
      %s423 = scalar_select %p422, %s23, 1
      %s424 = smul.addr %s423, 8
      %s425 = scalar_lea.vmem %s1, %s424
      %p426 = scmp.lt.s32.totalorder %s23, 1
      %s427 = scalar_select %p426, %s23, 1
      %s428 = smul.addr %s427, 2
      %s429 = smul.addr %s428, 4
      %s430 = scalar_lea.vmem %s12, %s429
      %v432 = vld [vmem:[%s4] sm:$0xf]
      %v433 = vld [vmem:[%s4 + $0x4] sm:$0xf]
      %v434 = vld [vmem:[%s4 + $0x8] sm:$0xf]
      %v435 = vld [vmem:[%s4 + $0xc] sm:$0xf]
      %v436 = vld [vmem:[%s425] sm:$0xff]
      %v437 = vpack.c.bf16 %v436, %v436
      %v442 = vunpack.c.l.b16 %v432
      %v443 = vunpack.c.l.b16 %v433
      %v444 = vunpack.c.l.b16 %v434
      %v445 = vunpack.c.l.b16 %v435
      %v446 = vpack.c.b16 %v443, %v442
      %v447 = vpack.c.b16 %v445, %v444
      %vm448 = vcmask 64512
      %v450 = vsel %vm448, %v446, 0
      %v453 = vsel %vm448, %v447, 0
      %vm455 = vcmask 1043456
      %v457 = vsel %vm455, %v437, 0
      %459 = vmatpush.bf16.msra.mxu0 0
      %460 = vmatpush.bf16.msra.mxu0 0
      %461 = vmatpush.bf16.msra.mxu0 0
      %462 = vmatpush.bf16.msra.mxu0 0
      %463 = vmatpush.bf16.msra.mxu0 0
      %464 = vmatpush.bf16.msra.mxu0 0
      %465 = vmatpush.bf16.msra.mxu0 0
      %466 = vmatpush.bf16.msra.mxu0 %v457
      %467 = vmatmul.bf16.gmra.mxu0 %v450
      %v468 = vpop.f32.mrf.mxu0
      %v469 = vadd.f32 0.0, %v468
      %v470 = vpop.f32.mrf.mxu0
      %v471 = vadd.f32 0.0, %v470
      %472 = vmatmul.bf16.gmra.mxu0 %v453
      %v473 = vpop.f32.mrf.mxu0
      %v474 = vadd.f32 0.0, %v473
      %v475 = vpop.f32.mrf.mxu0
      %v476 = vadd.f32 0.0, %v475
      %477 = vdwg.mxu0
      %v478 = vld [vmem:[%s5] sm:$0xff]
      %480 = vset.pattern.permute.xlu0 0
      %481 = vperm.xlu0 %480, %v478
      %v482 = vpop.permute.xlu0 %481
      %v484 = vld [vmem:[%s2] sm:$0xff]
      %v485 = vld [vmem:[%s2 + $0x8] sm:$0xff]
      %v486 = vld [vmem:[%s2 + $0x10] sm:$0xff]
      %v487 = vld [vmem:[%s2 + $0x18] sm:$0xff]
      %v488 = vld [vmem:[%s2 + $0x20] sm:$0xff]
      %v489 = vld [vmem:[%s2 + $0x28] sm:$0xff]
      %v490 = vld [vmem:[%s2 + $0x30] sm:$0xff]
      %v491 = vld [vmem:[%s2 + $0x38] sm:$0xff]
      %v492 = vpack.c.bf16 %v469, %v469
      %v501 = vunpack.c.l.b16 %v484
      %v502 = vunpack.c.h.b16 %v484
      %v503 = vunpack.c.l.b16 %v485
      %v504 = vunpack.c.h.b16 %v485
      %v505 = vunpack.c.l.b16 %v486
      %v506 = vunpack.c.h.b16 %v486
      %v507 = vunpack.c.l.b16 %v487
      %v508 = vunpack.c.h.b16 %v487
      %v509 = vunpack.c.l.b16 %v488
      %v510 = vunpack.c.h.b16 %v488
      %v511 = vunpack.c.l.b16 %v489
      %v512 = vunpack.c.h.b16 %v489
      %v513 = vunpack.c.l.b16 %v490
      %v514 = vunpack.c.h.b16 %v490
      %v515 = vunpack.c.l.b16 %v491
      %v516 = vunpack.c.h.b16 %v491
      %v517 = vpack.c.b16 %v503, %v501
      %v518 = vpack.c.b16 %v504, %v502
      %v519 = vpack.c.b16 %v507, %v505
      %v520 = vpack.c.b16 %v508, %v506
      %v521 = vpack.c.b16 %v511, %v509
      %v522 = vpack.c.b16 %v512, %v510
      %v523 = vpack.c.b16 %v515, %v513
      %v524 = vpack.c.b16 %v516, %v514
      %vm533 = vcmask 523264
      %v535 = vsel %vm533, %v492, 0
      %537 = vmatpush.bf16.msra.mxu0 0
      %538 = vmatpush.bf16.msra.mxu0 0
      %539 = vmatpush.bf16.msra.mxu0 0
      %540 = vmatpush.bf16.msra.mxu0 0
      %541 = vmatpush.bf16.msra.mxu0 %v523
      %542 = vmatpush.bf16.msra.mxu0 %v521
      %543 = vmatpush.bf16.msra.mxu0 %v519
      %544 = vmatpush.bf16.msra.mxu0 %v517
      %545 = vmatmul.bf16.gmra.mxu0 %v535
      %v546 = vpop.f32.mrf.mxu0
      %v547 = vadd.f32 0.0, %v546
      %v548 = vpop.f32.mrf.mxu0
      %549 = vdwg.mxu0
      %550 = vmatpush.bf16.msra.mxu0 0
      %551 = vmatpush.bf16.msra.mxu0 0
      %552 = vmatpush.bf16.msra.mxu0 0
      %553 = vmatpush.bf16.msra.mxu0 0
      %554 = vmatpush.bf16.msra.mxu0 %v524
      %555 = vmatpush.bf16.msra.mxu0 %v522
      %556 = vmatpush.bf16.msra.mxu0 %v520
      %557 = vmatpush.bf16.msra.mxu0 %v518
      %558 = vmatmul.bf16.gmra.mxu0 %v535
      %v559 = vpop.f32.mrf.mxu0
      %v560 = vadd.f32 0.0, %v559
      %v561 = vpop.f32.mrf.mxu0
      %562 = vdwg.mxu0
      %v563 = vadd.f32 %v482, %v547
      %v564 = vadd.f32 %v482, %v560
      %s565 = scalar_lea.vmem %s2, 64
      %v566 = vld [vmem:[%s565] sm:$0xff]
      %v567 = vld [vmem:[%s565 + $0x8] sm:$0xff]
      %v568 = vld [vmem:[%s565 + $0x10] sm:$0xff]
      %v569 = vld [vmem:[%s565 + $0x18] sm:$0xff]
      %v570 = vld [vmem:[%s565 + $0x20] sm:$0xff]
      %v571 = vld [vmem:[%s565 + $0x28] sm:$0xff]
      %v572 = vld [vmem:[%s565 + $0x30] sm:$0xff]
      %v573 = vld [vmem:[%s565 + $0x38] sm:$0xff]
      %v574 = vpack.c.bf16 %v471, %v471
      %v583 = vunpack.c.l.b16 %v566
      %v584 = vunpack.c.h.b16 %v566
      %v585 = vunpack.c.l.b16 %v567
      %v586 = vunpack.c.h.b16 %v567
      %v587 = vunpack.c.l.b16 %v568
      %v588 = vunpack.c.h.b16 %v568
      %v589 = vunpack.c.l.b16 %v569
      %v590 = vunpack.c.h.b16 %v569
      %v591 = vunpack.c.l.b16 %v570
      %v592 = vunpack.c.h.b16 %v570
      %v593 = vunpack.c.l.b16 %v571
      %v594 = vunpack.c.h.b16 %v571
      %v595 = vunpack.c.l.b16 %v572
      %v596 = vunpack.c.h.b16 %v572
      %v597 = vunpack.c.l.b16 %v573
      %v598 = vunpack.c.h.b16 %v573
      %v599 = vpack.c.b16 %v585, %v583
      %v600 = vpack.c.b16 %v586, %v584
      %v601 = vpack.c.b16 %v589, %v587
      %v602 = vpack.c.b16 %v590, %v588
      %v603 = vpack.c.b16 %v593, %v591
      %v604 = vpack.c.b16 %v594, %v592
      %v605 = vpack.c.b16 %v597, %v595
      %v606 = vpack.c.b16 %v598, %v596
      %v616 = vsel %vm533, %v574, 0
      %618 = vmatpush.bf16.msra.mxu0 0
      %619 = vmatpush.bf16.msra.mxu0 0
      %620 = vmatpush.bf16.msra.mxu0 0
      %621 = vmatpush.bf16.msra.mxu0 0
      %622 = vmatpush.bf16.msra.mxu0 %v605
      %623 = vmatpush.bf16.msra.mxu0 %v603
      %624 = vmatpush.bf16.msra.mxu0 %v601
      %625 = vmatpush.bf16.msra.mxu0 %v599
      %626 = vmatmul.bf16.gmra.mxu0 %v616
      %v627 = vpop.f32.mrf.mxu0
      %v628 = vadd.f32 0.0, %v627
      %v629 = vpop.f32.mrf.mxu0
      %630 = vdwg.mxu0
      %631 = vmatpush.bf16.msra.mxu0 0
      %632 = vmatpush.bf16.msra.mxu0 0
      %633 = vmatpush.bf16.msra.mxu0 0
      %634 = vmatpush.bf16.msra.mxu0 0
      %635 = vmatpush.bf16.msra.mxu0 %v606
      %636 = vmatpush.bf16.msra.mxu0 %v604
      %637 = vmatpush.bf16.msra.mxu0 %v602
      %638 = vmatpush.bf16.msra.mxu0 %v600
      %639 = vmatmul.bf16.gmra.mxu0 %v616
      %v640 = vpop.f32.mrf.mxu0
      %v641 = vadd.f32 0.0, %v640
      %v642 = vpop.f32.mrf.mxu0
      %643 = vdwg.mxu0
      %v644 = vadd.f32 %v563, %v628
      %v645 = vadd.f32 %v564, %v641
      %s646 = scalar_lea.vmem %s2, 128
      %v647 = vld [vmem:[%s646] sm:$0xff]
      %v648 = vld [vmem:[%s646 + $0x8] sm:$0xff]
      %v649 = vld [vmem:[%s646 + $0x10] sm:$0xff]
      %v650 = vld [vmem:[%s646 + $0x18] sm:$0xff]
      %v651 = vld [vmem:[%s646 + $0x20] sm:$0xff]
      %v652 = vld [vmem:[%s646 + $0x28] sm:$0xff]
      %v653 = vld [vmem:[%s646 + $0x30] sm:$0xff]
      %v654 = vld [vmem:[%s646 + $0x38] sm:$0xff]
      %v655 = vpack.c.bf16 %v474, %v474
      %v664 = vunpack.c.l.b16 %v647
      %v665 = vunpack.c.h.b16 %v647
      %v666 = vunpack.c.l.b16 %v648
      %v667 = vunpack.c.h.b16 %v648
      %v668 = vunpack.c.l.b16 %v649
      %v669 = vunpack.c.h.b16 %v649
      %v670 = vunpack.c.l.b16 %v650
      %v671 = vunpack.c.h.b16 %v650
      %v672 = vunpack.c.l.b16 %v651
      %v673 = vunpack.c.h.b16 %v651
      %v674 = vunpack.c.l.b16 %v652
      %v675 = vunpack.c.h.b16 %v652
      %v676 = vunpack.c.l.b16 %v653
      %v677 = vunpack.c.h.b16 %v653
      %v678 = vunpack.c.l.b16 %v654
      %v679 = vunpack.c.h.b16 %v654
      %v680 = vpack.c.b16 %v666, %v664
      %v681 = vpack.c.b16 %v667, %v665
      %v682 = vpack.c.b16 %v670, %v668
      %v683 = vpack.c.b16 %v671, %v669
      %v684 = vpack.c.b16 %v674, %v672
      %v685 = vpack.c.b16 %v675, %v673
      %v686 = vpack.c.b16 %v678, %v676
      %v687 = vpack.c.b16 %v679, %v677
      %v697 = vsel %vm533, %v655, 0
      %699 = vmatpush.bf16.msra.mxu0 0
      %700 = vmatpush.bf16.msra.mxu0 0
      %701 = vmatpush.bf16.msra.mxu0 0
      %702 = vmatpush.bf16.msra.mxu0 0
      %703 = vmatpush.bf16.msra.mxu0 %v686
      %704 = vmatpush.bf16.msra.mxu0 %v684
      %705 = vmatpush.bf16.msra.mxu0 %v682
      %706 = vmatpush.bf16.msra.mxu0 %v680
      %707 = vmatmul.bf16.gmra.mxu0 %v697
      %v708 = vpop.f32.mrf.mxu0
      %v709 = vadd.f32 0.0, %v708
      %v710 = vpop.f32.mrf.mxu0
      %711 = vdwg.mxu0
      %712 = vmatpush.bf16.msra.mxu0 0
      %713 = vmatpush.bf16.msra.mxu0 0
      %714 = vmatpush.bf16.msra.mxu0 0
      %715 = vmatpush.bf16.msra.mxu0 0
      %716 = vmatpush.bf16.msra.mxu0 %v687
      %717 = vmatpush.bf16.msra.mxu0 %v685
      %718 = vmatpush.bf16.msra.mxu0 %v683
      %719 = vmatpush.bf16.msra.mxu0 %v681
      %720 = vmatmul.bf16.gmra.mxu0 %v697
      %v721 = vpop.f32.mrf.mxu0
      %v722 = vadd.f32 0.0, %v721
      %v723 = vpop.f32.mrf.mxu0
      %724 = vdwg.mxu0
      %v725 = vadd.f32 %v644, %v709
      %v726 = vadd.f32 %v645, %v722
      %s727 = scalar_lea.vmem %s2, 192
      %v728 = vld [vmem:[%s727] sm:$0xff]
      %v729 = vld [vmem:[%s727 + $0x8] sm:$0xff]
      %v730 = vld [vmem:[%s727 + $0x10] sm:$0xff]
      %v731 = vld [vmem:[%s727 + $0x18] sm:$0xff]
      %v732 = vld [vmem:[%s727 + $0x20] sm:$0xff]
      %v733 = vld [vmem:[%s727 + $0x28] sm:$0xff]
      %v734 = vld [vmem:[%s727 + $0x30] sm:$0xff]
      %v735 = vld [vmem:[%s727 + $0x38] sm:$0xff]
      %v736 = vpack.c.bf16 %v476, %v476
      %v745 = vunpack.c.l.b16 %v728
      %v746 = vunpack.c.h.b16 %v728
      %v747 = vunpack.c.l.b16 %v729
      %v748 = vunpack.c.h.b16 %v729
      %v749 = vunpack.c.l.b16 %v730
      %v750 = vunpack.c.h.b16 %v730
      %v751 = vunpack.c.l.b16 %v731
      %v752 = vunpack.c.h.b16 %v731
      %v753 = vunpack.c.l.b16 %v732
      %v754 = vunpack.c.h.b16 %v732
      %v755 = vunpack.c.l.b16 %v733
      %v756 = vunpack.c.h.b16 %v733
      %v757 = vunpack.c.l.b16 %v734
      %v758 = vunpack.c.h.b16 %v734
      %v759 = vunpack.c.l.b16 %v735
      %v760 = vunpack.c.h.b16 %v735
      %v761 = vpack.c.b16 %v747, %v745
      %v762 = vpack.c.b16 %v748, %v746
      %v763 = vpack.c.b16 %v751, %v749
      %v764 = vpack.c.b16 %v752, %v750
      %v765 = vpack.c.b16 %v755, %v753
      %v766 = vpack.c.b16 %v756, %v754
      %v767 = vpack.c.b16 %v759, %v757
      %v768 = vpack.c.b16 %v760, %v758
      %v778 = vsel %vm533, %v736, 0
      %780 = vmatpush.bf16.msra.mxu0 0
      %781 = vmatpush.bf16.msra.mxu0 0
      %782 = vmatpush.bf16.msra.mxu0 0
      %783 = vmatpush.bf16.msra.mxu0 0
      %784 = vmatpush.bf16.msra.mxu0 %v767
      %785 = vmatpush.bf16.msra.mxu0 %v765
      %786 = vmatpush.bf16.msra.mxu0 %v763
      %787 = vmatpush.bf16.msra.mxu0 %v761
      %788 = vmatmul.bf16.gmra.mxu0 %v778
      %v789 = vpop.f32.mrf.mxu0
      %v790 = vadd.f32 0.0, %v789
      %v791 = vpop.f32.mrf.mxu0
      %792 = vdwg.mxu0
      %793 = vmatpush.bf16.msra.mxu0 0
      %794 = vmatpush.bf16.msra.mxu0 0
      %795 = vmatpush.bf16.msra.mxu0 0
      %796 = vmatpush.bf16.msra.mxu0 0
      %797 = vmatpush.bf16.msra.mxu0 %v768
      %798 = vmatpush.bf16.msra.mxu0 %v766
      %799 = vmatpush.bf16.msra.mxu0 %v764
      %800 = vmatpush.bf16.msra.mxu0 %v762
      %801 = vmatmul.bf16.gmra.mxu0 %v778
      %v802 = vpop.f32.mrf.mxu0
      %v803 = vadd.f32 0.0, %v802
      %v804 = vpop.f32.mrf.mxu0
      %805 = vdwg.mxu0
      %v806 = vadd.f32 %v725, %v790
      %v807 = vadd.f32 %v726, %v803
      %v808 = vld [vmem:[%s421] sm:$0xff]
      %v809 = vld [vmem:[%s421 + $0x8] sm:$0xff]
      %v810 = vld [vmem:[%s3] sm:$0x3]
      %v812 = vperm.slane %v810, 0
      %v813 = vperm.slane %v810, 1
      %814 = vrot.lane.b32.xlu0 %v812, 111
      %v815 = vpop.permute.xlu0 %814
      %816 = vrot.lane.b32.xlu0 %v813, 111
      %v817 = vpop.permute.xlu0 %816
      %vm818 = vcmask 908288
      %v819 = vsel %vm818, %v815, %v817
      %v823 = vmul.f32 %v815, 0.0
      %v824 = vmul.f32 %v808, %v819
      %v825 = vmul.f32 %v809, %v817
      %s826 = scalar_lea.vmem %s3, 2
      %v827 = vld [vmem:[%s826] sm:$0x3]
      %v829 = vperm.slane %v827, 0
      %v830 = vperm.slane %v827, 1
      %831 = vrot.lane.b32.xlu0 %v829, 112
      %v832 = vpop.permute.xlu0 %831
      %833 = vrot.lane.b32.xlu0 %v830, 112
      %v834 = vpop.permute.xlu0 %833
      %vm835 = vcmask 916480
      %v836 = vsel %vm835, %v832, %v834
      %v840 = vmul.f32 %v832, 0.0
      %v841 = vmul.f32 %v808, %v836
      %v842 = vmul.f32 %v809, %v834
      %s843 = scalar_lea.vmem %s3, 4
      %v844 = vld [vmem:[%s843] sm:$0x3]
      %v846 = vperm.slane %v844, 0
      %v847 = vperm.slane %v844, 1
      %848 = vrot.lane.b32.xlu0 %v846, 113
      %v849 = vpop.permute.xlu0 %848
      %850 = vrot.lane.b32.xlu0 %v847, 113
      %v851 = vpop.permute.xlu0 %850
      %vm852 = vcmask 924672
      %v853 = vsel %vm852, %v849, %v851
      %v857 = vmul.f32 %v849, 0.0
      %v858 = vmul.f32 %v808, %v853
      %v859 = vmul.f32 %v809, %v851
      %s860 = scalar_lea.vmem %s3, 6
      %v861 = vld [vmem:[%s860] sm:$0x3]
      %v863 = vperm.slane %v861, 0
      %v864 = vperm.slane %v861, 1
      %865 = vrot.lane.b32.xlu0 %v863, 127
      %v866 = vpop.permute.xlu0 %865
      %867 = vrot.lane.b32.xlu0 %v864, 127
      %v868 = vpop.permute.xlu0 %867
      %vm869 = vcmask 1039360
      %v870 = vsel %vm869, %v866, %v868
      %v874 = vmul.f32 %v866, 0.0
      %v875 = vmul.f32 %v808, %v870
      %v876 = vmul.f32 %v809, %v868
      %s877 = scalar_lea.vmem %s3, 8
      %v878 = vld [vmem:[%s877] sm:$0x3]
      %v880 = vperm.slane %v878, 0
      %v881 = vperm.slane %v878, 1
      %v884 = vmul.f32 %v808, %v880
      %v885 = vmul.f32 %v809, %v881
      %s886 = scalar_lea.vmem %s3, 10
      %v887 = vld [vmem:[%s886] sm:$0x3]
      %v889 = vperm.slane %v887, 0
      %v890 = vperm.slane %v887, 1
      %891 = vrot.lane.b32.xlu0 %v889, 1
      %v892 = vpop.permute.xlu0 %891
      %893 = vrot.lane.b32.xlu0 %v890, 1
      %v894 = vpop.permute.xlu0 %893
      %vm895 = vcmask 7168
      %v896 = vsel %vm895, %v892, %v894
      %v900 = vmul.f32 %v808, %v892
      %v901 = vmul.f32 %v809, %v896
      %v902 = vmul.f32 %v894, 0.0
      %s903 = scalar_lea.vmem %s3, 12
      %v904 = vld [vmem:[%s903] sm:$0x3]
      %v906 = vperm.slane %v904, 0
      %v907 = vperm.slane %v904, 1
      %908 = vrot.lane.b32.xlu0 %v906, 15
      %v909 = vpop.permute.xlu0 %908
      %910 = vrot.lane.b32.xlu0 %v907, 15
      %v911 = vpop.permute.xlu0 %910
      %vm912 = vcmask 121856
      %v913 = vsel %vm912, %v909, %v911
      %v917 = vmul.f32 %v808, %v909
      %v918 = vmul.f32 %v809, %v913
      %v919 = vmul.f32 %v911, 0.0
      %s920 = scalar_lea.vmem %s3, 14
      %v921 = vld [vmem:[%s920] sm:$0x3]
      %v923 = vperm.slane %v921, 0
      %v924 = vperm.slane %v921, 1
      %925 = vrot.lane.b32.xlu0 %v923, 16
      %v926 = vpop.permute.xlu0 %925
      %927 = vrot.lane.b32.xlu0 %v924, 16
      %v928 = vpop.permute.xlu0 %927
      %vm929 = vcmask 130048
      %v930 = vsel %vm929, %v926, %v928
      %v934 = vmul.f32 %v808, %v926
      %v935 = vmul.f32 %v809, %v930
      %v936 = vmul.f32 %v928, 0.0
      %s937 = scalar_lea.vmem %s3, 16
      %v938 = vld [vmem:[%s937] sm:$0x3]
      %v940 = vperm.slane %v938, 0
      %v941 = vperm.slane %v938, 1
      %942 = vrot.lane.b32.xlu0 %v940, 17
      %v943 = vpop.permute.xlu0 %942
      %944 = vrot.lane.b32.xlu0 %v941, 17
      %v945 = vpop.permute.xlu0 %944
      %vm946 = vcmask 138240
      %v947 = vsel %vm946, %v943, %v945
      %v951 = vmul.f32 %v808, %v943
      %v952 = vmul.f32 %v809, %v947
      %v953 = vmul.f32 %v945, 0.0
      %957 = vrot.lane.b32.xlu0 %v840, 127
      %v958 = vpop.permute.xlu0 %957
      %959 = vrot.lane.b32.xlu0 %v841, 127
      %v960 = vpop.permute.xlu0 %959
      %961 = vrot.lane.b32.xlu0 %v842, 127
      %v962 = vpop.permute.xlu0 %961
      %v963 = vsel %vm869, %v958, %v960
      %v964 = vsel %vm869, %v960, %v962
      %971 = vrot.lane.b32.xlu0 %v857, 126
      %v972 = vpop.permute.xlu0 %971
      %973 = vrot.lane.b32.xlu0 %v858, 126
      %v974 = vpop.permute.xlu0 %973
      %975 = vrot.lane.b32.xlu0 %v859, 126
      %v976 = vpop.permute.xlu0 %975
      %vm977 = vcmask 1031168
      %v978 = vsel %vm977, %v972, %v974
      %v979 = vsel %vm977, %v974, %v976
      %986 = vrot.lane.b32.xlu0 %v874, 112
      %v987 = vpop.permute.xlu0 %986
      %988 = vrot.lane.b32.xlu0 %v875, 112
      %v989 = vpop.permute.xlu0 %988
      %990 = vrot.lane.b32.xlu0 %v876, 112
      %v991 = vpop.permute.xlu0 %990
      %v992 = vsel %vm835, %v987, %v989
      %v993 = vsel %vm835, %v989, %v991
      %999 = vrot.lane.b32.xlu0 %v884, 111
      %v1000 = vpop.permute.xlu0 %999
      %1001 = vrot.lane.b32.xlu0 %v885, 111
      %v1002 = vpop.permute.xlu0 %1001
      %v1003 = vsel %vm818, %v1000, %v1002
      %1010 = vrot.lane.b32.xlu0 %v900, 110
      %v1011 = vpop.permute.xlu0 %1010
      %1012 = vrot.lane.b32.xlu0 %v901, 110
      %v1013 = vpop.permute.xlu0 %1012
      %1014 = vrot.lane.b32.xlu0 %v902, 110
      %v1015 = vpop.permute.xlu0 %1014
      %vm1016 = vcmask 900096
      %v1017 = vsel %vm1016, %v1011, %v1013
      %v1018 = vsel %vm1016, %v1013, %v1015
      %1025 = vrot.lane.b32.xlu0 %v917, 96
      %v1026 = vpop.permute.xlu0 %1025
      %1027 = vrot.lane.b32.xlu0 %v918, 96
      %v1028 = vpop.permute.xlu0 %1027
      %1029 = vrot.lane.b32.xlu0 %v919, 96
      %v1030 = vpop.permute.xlu0 %1029
      %vm1031 = vcmask 785408
      %v1032 = vsel %vm1031, %v1026, %v1028
      %v1033 = vsel %vm1031, %v1028, %v1030
      %1040 = vrot.lane.b32.xlu0 %v934, 95
      %v1041 = vpop.permute.xlu0 %1040
      %1042 = vrot.lane.b32.xlu0 %v935, 95
      %v1043 = vpop.permute.xlu0 %1042
      %1044 = vrot.lane.b32.xlu0 %v936, 95
      %v1045 = vpop.permute.xlu0 %1044
      %vm1046 = vcmask 777216
      %v1047 = vsel %vm1046, %v1041, %v1043
      %v1048 = vsel %vm1046, %v1043, %v1045
      %1055 = vrot.lane.b32.xlu0 %v951, 94
      %v1056 = vpop.permute.xlu0 %1055
      %1057 = vrot.lane.b32.xlu0 %v952, 94
      %v1058 = vpop.permute.xlu0 %1057
      %1059 = vrot.lane.b32.xlu0 %v953, 94
      %v1060 = vpop.permute.xlu0 %1059
      %vm1061 = vcmask 769024
      %v1062 = vsel %vm1061, %v1056, %v1058
      %v1063 = vsel %vm1061, %v1058, %v1060
      %v1067 = vmul.f32 %v806, %v819
      %v1068 = vmul.f32 %v807, %v817
      %v1069 = vmul.f32 %v806, %v836
      %v1070 = vmul.f32 %v807, %v834
      %v1071 = vmul.f32 %v806, %v853
      %v1072 = vmul.f32 %v807, %v851
      %v1073 = vmul.f32 %v806, %v870
      %v1074 = vmul.f32 %v807, %v868
      %v1075 = vmul.f32 %v806, %v880
      %v1076 = vmul.f32 %v807, %v881
      %v1077 = vmul.f32 %v806, %v892
      %v1078 = vmul.f32 %v807, %v896
      %v1079 = vmul.f32 %v806, %v909
      %v1080 = vmul.f32 %v807, %v913
      %v1081 = vmul.f32 %v806, %v926
      %v1082 = vmul.f32 %v807, %v930
      %v1083 = vmul.f32 %v806, %v943
      %v1084 = vmul.f32 %v807, %v947
      %1087 = vrot.lane.b32.xlu0 %v1069, 127
      %v1088 = vpop.permute.xlu0 %1087
      %1089 = vrot.lane.b32.xlu0 %v1070, 127
      %v1090 = vpop.permute.xlu0 %1089
      %v1091 = vsel %vm869, %v958, %v1088
      %v1092 = vsel %vm869, %v1088, %v1090
      %1098 = vrot.lane.b32.xlu0 %v1071, 126
      %v1099 = vpop.permute.xlu0 %1098
      %1100 = vrot.lane.b32.xlu0 %v1072, 126
      %v1101 = vpop.permute.xlu0 %1100
      %v1102 = vsel %vm977, %v972, %v1099
      %v1103 = vsel %vm977, %v1099, %v1101
      %1109 = vrot.lane.b32.xlu0 %v1073, 112
      %v1110 = vpop.permute.xlu0 %1109
      %1111 = vrot.lane.b32.xlu0 %v1074, 112
      %v1112 = vpop.permute.xlu0 %1111
      %v1113 = vsel %vm835, %v987, %v1110
      %v1114 = vsel %vm835, %v1110, %v1112
      %1120 = vrot.lane.b32.xlu0 %v1075, 111
      %v1121 = vpop.permute.xlu0 %1120
      %1122 = vrot.lane.b32.xlu0 %v1076, 111
      %v1123 = vpop.permute.xlu0 %1122
      %v1124 = vsel %vm818, %v1121, %v1123
      %1130 = vrot.lane.b32.xlu0 %v1077, 110
      %v1131 = vpop.permute.xlu0 %1130
      %1132 = vrot.lane.b32.xlu0 %v1078, 110
      %v1133 = vpop.permute.xlu0 %1132
      %v1134 = vsel %vm1016, %v1131, %v1133
      %v1135 = vsel %vm1016, %v1133, %v1015
      %1141 = vrot.lane.b32.xlu0 %v1079, 96
      %v1142 = vpop.permute.xlu0 %1141
      %1143 = vrot.lane.b32.xlu0 %v1080, 96
      %v1144 = vpop.permute.xlu0 %1143
      %v1145 = vsel %vm1031, %v1142, %v1144
      %v1146 = vsel %vm1031, %v1144, %v1030
      %1152 = vrot.lane.b32.xlu0 %v1081, 95
      %v1153 = vpop.permute.xlu0 %1152
      %1154 = vrot.lane.b32.xlu0 %v1082, 95
      %v1155 = vpop.permute.xlu0 %1154
      %v1156 = vsel %vm1046, %v1153, %v1155
      %v1157 = vsel %vm1046, %v1155, %v1045
      %1163 = vrot.lane.b32.xlu0 %v1083, 94
      %v1164 = vpop.permute.xlu0 %1163
      %1165 = vrot.lane.b32.xlu0 %v1084, 94
      %v1166 = vpop.permute.xlu0 %1165
      %v1167 = vsel %vm1061, %v1164, %v1166
      %v1168 = vsel %vm1061, %v1166, %v1060
      %v1172 = vld [vmem:[%s6] sm:$0xff]
      %v1173 = vpack.c.bf16 %v963, %v823
      %v1174 = vpack.c.bf16 %v964, %v824
      %v1175 = vpack.c.bf16 %v962, %v825
      %v1176 = vpack.c.bf16 %v992, %v978
      %v1177 = vpack.c.bf16 %v993, %v979
      %v1178 = vpack.c.bf16 %v991, %v976
      %v1179 = vpack.c.bf16 %v1011, %v1000
      %v1180 = vpack.c.bf16 %v1017, %v1003
      %v1181 = vpack.c.bf16 %v1018, %v1002
      %v1182 = vpack.c.bf16 %v1041, %v1026
      %v1183 = vpack.c.bf16 %v1047, %v1032
      %v1184 = vpack.c.bf16 %v1048, %v1033
      %v1185 = vpack.c.bf16 %v823, %v1056
      %v1186 = vpack.c.bf16 %v1067, %v1062
      %v1187 = vpack.c.bf16 %v1068, %v1063
      %v1188 = vpack.c.bf16 %v1102, %v1091
      %v1189 = vpack.c.bf16 %v1103, %v1092
      %v1190 = vpack.c.bf16 %v1101, %v1090
      %v1191 = vpack.c.bf16 %v1121, %v1113
      %v1192 = vpack.c.bf16 %v1124, %v1114
      %v1193 = vpack.c.bf16 %v1123, %v1112
      %v1194 = vpack.c.bf16 %v1142, %v1131
      %v1195 = vpack.c.bf16 %v1145, %v1134
      %v1196 = vpack.c.bf16 %v1146, %v1135
      %v1197 = vpack.c.bf16 %v1164, %v1153
      %v1198 = vpack.c.bf16 %v1167, %v1156
      %v1199 = vpack.c.bf16 %v1168, %v1157
      %v1200 = vld [vmem:[%s7] sm:$0xff]
      %1202 = vset.pattern.permute.xlu0 0
      %1203 = vperm.xlu0 %1202, %v1200
      %v1204 = vpop.permute.xlu0 %1203
      %v1207 = vunpack.c.l.b16 %v1172
      %v1208 = vunpack.c.h.b16 %v1172
      %v1209 = vpack.c.b16 %v1207, %v1207
      %v1210 = vpack.c.b16 %v1208, %v1208
      %1239 = vrot.lane.b32.xlu0 %v1173, 17
      %v1240 = vpop.permute.xlu0 %1239
      %1241 = vrot.lane.b32.xlu0 %v1174, 17
      %v1242 = vpop.permute.xlu0 %1241
      %1243 = vrot.lane.b32.xlu0 %v1175, 17
      %v1244 = vpop.permute.xlu0 %1243
      %1245 = vrot.lane.b32.xlu0 %v1176, 17
      %v1246 = vpop.permute.xlu0 %1245
      %1247 = vrot.lane.b32.xlu0 %v1177, 17
      %v1248 = vpop.permute.xlu0 %1247
      %1249 = vrot.lane.b32.xlu0 %v1178, 17
      %v1250 = vpop.permute.xlu0 %1249
      %1251 = vrot.lane.b32.xlu0 %v1179, 17
      %v1252 = vpop.permute.xlu0 %1251
      %1253 = vrot.lane.b32.xlu0 %v1180, 17
      %v1254 = vpop.permute.xlu0 %1253
      %1255 = vrot.lane.b32.xlu0 %v1181, 17
      %v1256 = vpop.permute.xlu0 %1255
      %1257 = vrot.lane.b32.xlu0 %v1182, 17
      %v1258 = vpop.permute.xlu0 %1257
      %1259 = vrot.lane.b32.xlu0 %v1183, 17
      %v1260 = vpop.permute.xlu0 %1259
      %1261 = vrot.lane.b32.xlu0 %v1184, 17
      %v1262 = vpop.permute.xlu0 %1261
      %1263 = vrot.lane.b32.xlu0 %v1185, 17
      %v1264 = vpop.permute.xlu0 %1263
      %1265 = vrot.lane.b32.xlu0 %v1186, 17
      %v1266 = vpop.permute.xlu0 %1265
      %1267 = vrot.lane.b32.xlu0 %v1187, 17
      %v1268 = vpop.permute.xlu0 %1267
      %1269 = vrot.lane.b32.xlu0 %v1188, 17
      %v1270 = vpop.permute.xlu0 %1269
      %1271 = vrot.lane.b32.xlu0 %v1189, 17
      %v1272 = vpop.permute.xlu0 %1271
      %1273 = vrot.lane.b32.xlu0 %v1190, 17
      %v1274 = vpop.permute.xlu0 %1273
      %1275 = vrot.lane.b32.xlu0 %v1191, 17
      %v1276 = vpop.permute.xlu0 %1275
      %1277 = vrot.lane.b32.xlu0 %v1192, 17
      %v1278 = vpop.permute.xlu0 %1277
      %1279 = vrot.lane.b32.xlu0 %v1193, 17
      %v1280 = vpop.permute.xlu0 %1279
      %1281 = vrot.lane.b32.xlu0 %v1194, 17
      %v1282 = vpop.permute.xlu0 %1281
      %1283 = vrot.lane.b32.xlu0 %v1195, 17
      %v1284 = vpop.permute.xlu0 %1283
      %1285 = vrot.lane.b32.xlu0 %v1196, 17
      %v1286 = vpop.permute.xlu0 %1285
      %1287 = vrot.lane.b32.xlu0 %v1197, 17
      %v1288 = vpop.permute.xlu0 %1287
      %1289 = vrot.lane.b32.xlu0 %v1198, 17
      %v1290 = vpop.permute.xlu0 %1289
      %1291 = vrot.lane.b32.xlu0 %v1199, 17
      %v1292 = vpop.permute.xlu0 %1291
      %vm1293 = vcmask 138240
      %v1294 = vsel %vm1293, %v1240, %v1242
      %v1295 = vsel %vm1293, %v1242, %v1244
      %v1296 = vsel %vm1293, %v1246, %v1248
      %v1297 = vsel %vm1293, %v1248, %v1250
      %v1298 = vsel %vm1293, %v1252, %v1254
      %v1299 = vsel %vm1293, %v1254, %v1256
      %v1300 = vsel %vm1293, %v1258, %v1260
      %v1301 = vsel %vm1293, %v1260, %v1262
      %v1302 = vsel %vm1293, %v1264, %v1266
      %v1303 = vsel %vm1293, %v1266, %v1268
      %v1304 = vsel %vm1293, %v1270, %v1272
      %v1305 = vsel %vm1293, %v1272, %v1274
      %v1306 = vsel %vm1293, %v1276, %v1278
      %v1307 = vsel %vm1293, %v1278, %v1280
      %v1308 = vsel %vm1293, %v1282, %v1284
      %v1309 = vsel %vm1293, %v1284, %v1286
      %v1310 = vsel %vm1293, %v1288, %v1290
      %v1311 = vsel %vm1293, %v1290, %v1292
      %v1331 = vsel %vm929, %v1210, 0
      %1333 = vmatpush.bf16.msra.mxu0 %v1308
      %1334 = vmatpush.bf16.msra.mxu0 %v1306
      %1335 = vmatpush.bf16.msra.mxu0 %v1304
      %1336 = vmatpush.bf16.msra.mxu0 %v1302
      %1337 = vmatpush.bf16.msra.mxu0 %v1300
      %1338 = vmatpush.bf16.msra.mxu0 %v1298
      %1339 = vmatpush.bf16.msra.mxu0 %v1296
      %1340 = vmatpush.bf16.msra.mxu0 %v1294
      %1341 = vmatmul.bf16.gmra.mxu0 %v1209
      %v1342 = vpop.f32.mrf.mxu0
      %v1343 = vadd.f32 %v1204, %v1342
      %v1344 = vpop.f32.mrf.mxu0
      %1345 = vdwg.mxu0
      %1346 = vmatpush.bf16.msra.mxu0 0
      %1347 = vmatpush.bf16.msra.mxu0 0
      %1348 = vmatpush.bf16.msra.mxu0 0
      %1349 = vmatpush.bf16.msra.mxu0 0
      %1350 = vmatpush.bf16.msra.mxu0 0
      %1351 = vmatpush.bf16.msra.mxu0 0
      %1352 = vmatpush.bf16.msra.mxu0 0
      %1353 = vmatpush.bf16.msra.mxu0 %v1310
      %1354 = vmatmul.bf16.gmra.mxu0 %v1331
      %v1355 = vpop.f32.mrf.mxu0
      %v1356 = vadd.f32 %v1343, %v1355
      %v1357 = vpop.f32.mrf.mxu0
      %1358 = vdwg.mxu0
      %1359 = vmatpush.bf16.msra.mxu0 %v1309
      %1360 = vmatpush.bf16.msra.mxu0 %v1307
      %1361 = vmatpush.bf16.msra.mxu0 %v1305
      %1362 = vmatpush.bf16.msra.mxu0 %v1303
      %1363 = vmatpush.bf16.msra.mxu0 %v1301
      %1364 = vmatpush.bf16.msra.mxu0 %v1299
      %1365 = vmatpush.bf16.msra.mxu0 %v1297
      %1366 = vmatpush.bf16.msra.mxu0 %v1295
      %1367 = vmatmul.bf16.gmra.mxu0 %v1209
      %v1368 = vpop.f32.mrf.mxu0
      %v1369 = vadd.f32 %v1204, %v1368
      %v1370 = vpop.f32.mrf.mxu0
      %1371 = vdwg.mxu0
      %1372 = vmatpush.bf16.msra.mxu0 0
      %1373 = vmatpush.bf16.msra.mxu0 0
      %1374 = vmatpush.bf16.msra.mxu0 0
      %1375 = vmatpush.bf16.msra.mxu0 0
      %1376 = vmatpush.bf16.msra.mxu0 0
      %1377 = vmatpush.bf16.msra.mxu0 0
      %1378 = vmatpush.bf16.msra.mxu0 0
      %1379 = vmatpush.bf16.msra.mxu0 %v1311
      %1380 = vmatmul.bf16.gmra.mxu0 %v1331
      %v1381 = vpop.f32.mrf.mxu0
      %v1382 = vadd.f32 %v1369, %v1381
      %v1383 = vpop.f32.mrf.mxu0
      %1384 = vdwg.mxu0
      %v1385 = vmax.f32 %v1356, 0.0
      %v1386 = vmax.f32 %v1382, 0.0
      %v1387 = vld [vmem:[%s8] sm:$0xf]
      %v1388 = vmul.f32 %v1385, %v819
      %v1389 = vmul.f32 %v1386, %v817
      %v1390 = vmul.f32 %v1385, %v836
      %v1391 = vmul.f32 %v1386, %v834
      %v1392 = vmul.f32 %v1385, %v853
      %v1393 = vmul.f32 %v1386, %v851
      %v1394 = vmul.f32 %v1385, %v870
      %v1395 = vmul.f32 %v1386, %v868
      %v1396 = vmul.f32 %v1385, %v880
      %v1397 = vmul.f32 %v1386, %v881
      %v1398 = vmul.f32 %v1385, %v892
      %v1399 = vmul.f32 %v1386, %v896
      %v1400 = vmul.f32 %v1385, %v909
      %v1401 = vmul.f32 %v1386, %v913
      %v1402 = vmul.f32 %v1385, %v926
      %v1403 = vmul.f32 %v1386, %v930
      %v1404 = vmul.f32 %v1385, %v943
      %v1405 = vmul.f32 %v1386, %v947
      %1408 = vrot.lane.b32.xlu0 %v1390, 127
      %v1409 = vpop.permute.xlu0 %1408
      %1410 = vrot.lane.b32.xlu0 %v1391, 127
      %v1411 = vpop.permute.xlu0 %1410
      %v1412 = vsel %vm869, %v958, %v1409
      %v1413 = vsel %vm869, %v1409, %v1411
      %1419 = vrot.lane.b32.xlu0 %v1392, 126
      %v1420 = vpop.permute.xlu0 %1419
      %1421 = vrot.lane.b32.xlu0 %v1393, 126
      %v1422 = vpop.permute.xlu0 %1421
      %v1423 = vsel %vm977, %v972, %v1420
      %v1424 = vsel %vm977, %v1420, %v1422
      %1430 = vrot.lane.b32.xlu0 %v1394, 112
      %v1431 = vpop.permute.xlu0 %1430
      %1432 = vrot.lane.b32.xlu0 %v1395, 112
      %v1433 = vpop.permute.xlu0 %1432
      %v1434 = vsel %vm835, %v987, %v1431
      %v1435 = vsel %vm835, %v1431, %v1433
      %1441 = vrot.lane.b32.xlu0 %v1396, 111
      %v1442 = vpop.permute.xlu0 %1441
      %1443 = vrot.lane.b32.xlu0 %v1397, 111
      %v1444 = vpop.permute.xlu0 %1443
      %v1445 = vsel %vm818, %v1442, %v1444
      %1451 = vrot.lane.b32.xlu0 %v1398, 110
      %v1452 = vpop.permute.xlu0 %1451
      %1453 = vrot.lane.b32.xlu0 %v1399, 110
      %v1454 = vpop.permute.xlu0 %1453
      %v1455 = vsel %vm1016, %v1452, %v1454
      %v1456 = vsel %vm1016, %v1454, %v1015
      %1462 = vrot.lane.b32.xlu0 %v1400, 96
      %v1463 = vpop.permute.xlu0 %1462
      %1464 = vrot.lane.b32.xlu0 %v1401, 96
      %v1465 = vpop.permute.xlu0 %1464
      %v1466 = vsel %vm1031, %v1463, %v1465
      %v1467 = vsel %vm1031, %v1465, %v1030
      %1473 = vrot.lane.b32.xlu0 %v1402, 95
      %v1474 = vpop.permute.xlu0 %1473
      %1475 = vrot.lane.b32.xlu0 %v1403, 95
      %v1476 = vpop.permute.xlu0 %1475
      %v1477 = vsel %vm1046, %v1474, %v1476
      %v1478 = vsel %vm1046, %v1476, %v1045
      %1484 = vrot.lane.b32.xlu0 %v1404, 94
      %v1485 = vpop.permute.xlu0 %1484
      %1486 = vrot.lane.b32.xlu0 %v1405, 94
      %v1487 = vpop.permute.xlu0 %1486
      %v1488 = vsel %vm1061, %v1485, %v1487
      %v1489 = vsel %vm1061, %v1487, %v1060
      %v1493 = vpack.c.bf16 %v1412, %v823
      %v1494 = vpack.c.bf16 %v1413, %v1388
      %v1495 = vpack.c.bf16 %v1411, %v1389
      %v1496 = vpack.c.bf16 %v1434, %v1423
      %v1497 = vpack.c.bf16 %v1435, %v1424
      %v1498 = vpack.c.bf16 %v1433, %v1422
      %v1499 = vpack.c.bf16 %v1452, %v1442
      %v1500 = vpack.c.bf16 %v1455, %v1445
      %v1501 = vpack.c.bf16 %v1456, %v1444
      %v1502 = vpack.c.bf16 %v1474, %v1463
      %v1503 = vpack.c.bf16 %v1477, %v1466
      %v1504 = vpack.c.bf16 %v1478, %v1467
      %v1505 = vpack.c.bf16 %v1485, %v1485
      %v1506 = vpack.c.bf16 %v1488, %v1488
      %v1507 = vpack.c.bf16 %v1489, %v1489
      %1523 = vrot.lane.b32.xlu0 %v1493, 17
      %v1524 = vpop.permute.xlu0 %1523
      %1525 = vrot.lane.b32.xlu0 %v1494, 17
      %v1526 = vpop.permute.xlu0 %1525
      %1527 = vrot.lane.b32.xlu0 %v1495, 17
      %v1528 = vpop.permute.xlu0 %1527
      %1529 = vrot.lane.b32.xlu0 %v1496, 17
      %v1530 = vpop.permute.xlu0 %1529
      %1531 = vrot.lane.b32.xlu0 %v1497, 17
      %v1532 = vpop.permute.xlu0 %1531
      %1533 = vrot.lane.b32.xlu0 %v1498, 17
      %v1534 = vpop.permute.xlu0 %1533
      %1535 = vrot.lane.b32.xlu0 %v1499, 17
      %v1536 = vpop.permute.xlu0 %1535
      %1537 = vrot.lane.b32.xlu0 %v1500, 17
      %v1538 = vpop.permute.xlu0 %1537
      %1539 = vrot.lane.b32.xlu0 %v1501, 17
      %v1540 = vpop.permute.xlu0 %1539
      %1541 = vrot.lane.b32.xlu0 %v1502, 17
      %v1542 = vpop.permute.xlu0 %1541
      %1543 = vrot.lane.b32.xlu0 %v1503, 17
      %v1544 = vpop.permute.xlu0 %1543
      %1545 = vrot.lane.b32.xlu0 %v1504, 17
      %v1546 = vpop.permute.xlu0 %1545
      %1547 = vrot.lane.b32.xlu0 %v1505, 17
      %v1548 = vpop.permute.xlu0 %1547
      %1549 = vrot.lane.b32.xlu0 %v1506, 17
      %v1550 = vpop.permute.xlu0 %1549
      %1551 = vrot.lane.b32.xlu0 %v1507, 17
      %v1552 = vpop.permute.xlu0 %1551
      %v1553 = vsel %vm1293, %v1524, %v1526
      %v1554 = vsel %vm1293, %v1526, %v1528
      %v1555 = vsel %vm1293, %v1530, %v1532
      %v1556 = vsel %vm1293, %v1532, %v1534
      %v1557 = vsel %vm1293, %v1536, %v1538
      %v1558 = vsel %vm1293, %v1538, %v1540
      %v1559 = vsel %vm1293, %v1542, %v1544
      %v1560 = vsel %vm1293, %v1544, %v1546
      %v1561 = vsel %vm1293, %v1548, %v1550
      %v1562 = vsel %vm1293, %v1550, %v1552
      %vm1571 = vcmask 588800
      %v1573 = vsel %vm1571, %v1387, 0
      %v1576 = vsel %vm455, %v1561, 0
      %v1579 = vsel %vm455, %v1562, 0
      %1581 = vmatpush.bf16.msra.mxu0 0
      %1582 = vmatpush.bf16.msra.mxu0 0
      %1583 = vmatpush.bf16.msra.mxu0 0
      %1584 = vmatpush.bf16.msra.mxu0 %v1576
      %1585 = vmatpush.bf16.msra.mxu0 %v1559
      %1586 = vmatpush.bf16.msra.mxu0 %v1557
      %1587 = vmatpush.bf16.msra.mxu0 %v1555
      %1588 = vmatpush.bf16.msra.mxu0 %v1553
      %1589 = vmatmul.bf16.gmra.mxu0 %v1573
      %v1590 = vpop.f32.mrf.mxu0
      %v1591 = vadd.f32 0.0, %v1590
      %v1592 = vpop.f32.mrf.mxu0
      %1593 = vdwg.mxu0
      %1594 = vmatpush.bf16.msra.mxu0 0
      %1595 = vmatpush.bf16.msra.mxu0 0
      %1596 = vmatpush.bf16.msra.mxu0 0
      %1597 = vmatpush.bf16.msra.mxu0 %v1579
      %1598 = vmatpush.bf16.msra.mxu0 %v1560
      %1599 = vmatpush.bf16.msra.mxu0 %v1558
      %1600 = vmatpush.bf16.msra.mxu0 %v1556
      %1601 = vmatpush.bf16.msra.mxu0 %v1554
      %1602 = vmatmul.bf16.gmra.mxu0 %v1573
      %v1603 = vpop.f32.mrf.mxu0
      %v1604 = vadd.f32 0.0, %v1603
      %v1605 = vpop.f32.mrf.mxu0
      %1606 = vdwg.mxu0
      %v1607 = vadd.f32 %v1385, %v1591
      %v1608 = vadd.f32 %v1386, %v1604
      %v1609 = vld [vmem:[%s9] sm:$0xff]
      %1611 = vset.pattern.permute.xlu0 0
      %1612 = vperm.xlu0 %1611, %v1609
      %v1613 = vpop.permute.xlu0 %1612
      %v1615 = vadd.f32 %v1607, %v1613
      %v1616 = vadd.f32 %v1608, %v1613
      %v1617 = vmax.f32 %v1615, 0.0
      %v1618 = vmax.f32 %v1616, 0.0
      %v1619 = vld [vmem:[%s10] sm:$0x3]
      %v1620 = vmul.f32 %v1617, %v819
      %v1621 = vmul.f32 %v1618, %v817
      %v1622 = vmul.f32 %v1617, %v836
      %v1623 = vmul.f32 %v1618, %v834
      %v1624 = vmul.f32 %v1617, %v853
      %v1625 = vmul.f32 %v1618, %v851
      %v1626 = vmul.f32 %v1617, %v870
      %v1627 = vmul.f32 %v1618, %v868
      %v1628 = vmul.f32 %v1617, %v880
      %v1629 = vmul.f32 %v1618, %v881
      %v1630 = vmul.f32 %v1617, %v892
      %v1631 = vmul.f32 %v1618, %v896
      %v1632 = vmul.f32 %v1617, %v909
      %v1633 = vmul.f32 %v1618, %v913
      %v1634 = vmul.f32 %v1617, %v926
      %v1635 = vmul.f32 %v1618, %v930
      %v1636 = vmul.f32 %v1617, %v943
      %v1637 = vmul.f32 %v1618, %v947
      %1640 = vrot.lane.b32.xlu0 %v1622, 127
      %v1641 = vpop.permute.xlu0 %1640
      %1642 = vrot.lane.b32.xlu0 %v1623, 127
      %v1643 = vpop.permute.xlu0 %1642
      %v1644 = vsel %vm869, %v958, %v1641
      %v1645 = vsel %vm869, %v1641, %v1643
      %1651 = vrot.lane.b32.xlu0 %v1624, 126
      %v1652 = vpop.permute.xlu0 %1651
      %1653 = vrot.lane.b32.xlu0 %v1625, 126
      %v1654 = vpop.permute.xlu0 %1653
      %v1655 = vsel %vm977, %v972, %v1652
      %v1656 = vsel %vm977, %v1652, %v1654
      %1662 = vrot.lane.b32.xlu0 %v1626, 112
      %v1663 = vpop.permute.xlu0 %1662
      %1664 = vrot.lane.b32.xlu0 %v1627, 112
      %v1665 = vpop.permute.xlu0 %1664
      %v1666 = vsel %vm835, %v987, %v1663
      %v1667 = vsel %vm835, %v1663, %v1665
      %1673 = vrot.lane.b32.xlu0 %v1628, 111
      %v1674 = vpop.permute.xlu0 %1673
      %1675 = vrot.lane.b32.xlu0 %v1629, 111
      %v1676 = vpop.permute.xlu0 %1675
      %v1677 = vsel %vm818, %v1674, %v1676
      %1683 = vrot.lane.b32.xlu0 %v1630, 110
      %v1684 = vpop.permute.xlu0 %1683
      %1685 = vrot.lane.b32.xlu0 %v1631, 110
      %v1686 = vpop.permute.xlu0 %1685
      %v1687 = vsel %vm1016, %v1684, %v1686
      %v1688 = vsel %vm1016, %v1686, %v1015
      %1694 = vrot.lane.b32.xlu0 %v1632, 96
      %v1695 = vpop.permute.xlu0 %1694
      %1696 = vrot.lane.b32.xlu0 %v1633, 96
      %v1697 = vpop.permute.xlu0 %1696
      %v1698 = vsel %vm1031, %v1695, %v1697
      %v1699 = vsel %vm1031, %v1697, %v1030
      %1705 = vrot.lane.b32.xlu0 %v1634, 95
      %v1706 = vpop.permute.xlu0 %1705
      %1707 = vrot.lane.b32.xlu0 %v1635, 95
      %v1708 = vpop.permute.xlu0 %1707
      %v1709 = vsel %vm1046, %v1706, %v1708
      %v1710 = vsel %vm1046, %v1708, %v1045
      %1716 = vrot.lane.b32.xlu0 %v1636, 94
      %v1717 = vpop.permute.xlu0 %1716
      %1718 = vrot.lane.b32.xlu0 %v1637, 94
      %v1719 = vpop.permute.xlu0 %1718
      %v1720 = vsel %vm1061, %v1717, %v1719
      %v1721 = vsel %vm1061, %v1719, %v1060
      %v1725 = vpack.c.bf16 %v1644, %v823
      %v1726 = vpack.c.bf16 %v1645, %v1620
      %v1727 = vpack.c.bf16 %v1643, %v1621
      %v1728 = vpack.c.bf16 %v1666, %v1655
      %v1729 = vpack.c.bf16 %v1667, %v1656
      %v1730 = vpack.c.bf16 %v1665, %v1654
      %v1731 = vpack.c.bf16 %v1684, %v1674
      %v1732 = vpack.c.bf16 %v1687, %v1677
      %v1733 = vpack.c.bf16 %v1688, %v1676
      %v1734 = vpack.c.bf16 %v1706, %v1695
      %v1735 = vpack.c.bf16 %v1709, %v1698
      %v1736 = vpack.c.bf16 %v1710, %v1699
      %v1737 = vpack.c.bf16 %v1717, %v1717
      %v1738 = vpack.c.bf16 %v1720, %v1720
      %v1739 = vpack.c.bf16 %v1721, %v1721
      %v1740 = vld [vmem:[%s11] sm:$0xf]
      %1742 = vset.pattern.permute.xlu0 0
      %1743 = vperm.xlu0 %1742, %v1740
      %v1744 = vpop.permute.xlu0 %1743
      %1761 = vrot.lane.b32.xlu0 %v1725, 17
      %v1762 = vpop.permute.xlu0 %1761
      %1763 = vrot.lane.b32.xlu0 %v1726, 17
      %v1764 = vpop.permute.xlu0 %1763
      %1765 = vrot.lane.b32.xlu0 %v1727, 17
      %v1766 = vpop.permute.xlu0 %1765
      %1767 = vrot.lane.b32.xlu0 %v1728, 17
      %v1768 = vpop.permute.xlu0 %1767
      %1769 = vrot.lane.b32.xlu0 %v1729, 17
      %v1770 = vpop.permute.xlu0 %1769
      %1771 = vrot.lane.b32.xlu0 %v1730, 17
      %v1772 = vpop.permute.xlu0 %1771
      %1773 = vrot.lane.b32.xlu0 %v1731, 17
      %v1774 = vpop.permute.xlu0 %1773
      %1775 = vrot.lane.b32.xlu0 %v1732, 17
      %v1776 = vpop.permute.xlu0 %1775
      %1777 = vrot.lane.b32.xlu0 %v1733, 17
      %v1778 = vpop.permute.xlu0 %1777
      %1779 = vrot.lane.b32.xlu0 %v1734, 17
      %v1780 = vpop.permute.xlu0 %1779
      %1781 = vrot.lane.b32.xlu0 %v1735, 17
      %v1782 = vpop.permute.xlu0 %1781
      %1783 = vrot.lane.b32.xlu0 %v1736, 17
      %v1784 = vpop.permute.xlu0 %1783
      %1785 = vrot.lane.b32.xlu0 %v1737, 17
      %v1786 = vpop.permute.xlu0 %1785
      %1787 = vrot.lane.b32.xlu0 %v1738, 17
      %v1788 = vpop.permute.xlu0 %1787
      %1789 = vrot.lane.b32.xlu0 %v1739, 17
      %v1790 = vpop.permute.xlu0 %1789
      %v1791 = vsel %vm1293, %v1762, %v1764
      %v1792 = vsel %vm1293, %v1764, %v1766
      %v1793 = vsel %vm1293, %v1768, %v1770
      %v1794 = vsel %vm1293, %v1770, %v1772
      %v1795 = vsel %vm1293, %v1774, %v1776
      %v1796 = vsel %vm1293, %v1776, %v1778
      %v1797 = vsel %vm1293, %v1780, %v1782
      %v1798 = vsel %vm1293, %v1782, %v1784
      %v1799 = vsel %vm1293, %v1786, %v1788
      %v1800 = vsel %vm1293, %v1788, %v1790
      %v1810 = vsel %vm1571, %v1619, 0
      %v1813 = vsel %vm455, %v1799, 0
      %v1816 = vsel %vm455, %v1800, 0
      %1818 = vmatpush.bf16.msra.mxu0 0
      %1819 = vmatpush.bf16.msra.mxu0 0
      %1820 = vmatpush.bf16.msra.mxu0 0
      %1821 = vmatpush.bf16.msra.mxu0 %v1813
      %1822 = vmatpush.bf16.msra.mxu0 %v1797
      %1823 = vmatpush.bf16.msra.mxu0 %v1795
      %1824 = vmatpush.bf16.msra.mxu0 %v1793
      %1825 = vmatpush.bf16.msra.mxu0 %v1791
      %1826 = vmatmul.bf16.gmra.mxu0 %v1810
      %v1827 = vpop.f32.mrf.mxu0
      %v1828 = vadd.f32 %v1744, %v1827
      %v1829 = vpop.f32.mrf.mxu0
      %1830 = vdwg.mxu0
      %1831 = vmatpush.bf16.msra.mxu0 0
      %1832 = vmatpush.bf16.msra.mxu0 0
      %1833 = vmatpush.bf16.msra.mxu0 0
      %1834 = vmatpush.bf16.msra.mxu0 %v1816
      %1835 = vmatpush.bf16.msra.mxu0 %v1798
      %1836 = vmatpush.bf16.msra.mxu0 %v1796
      %1837 = vmatpush.bf16.msra.mxu0 %v1794
      %1838 = vmatpush.bf16.msra.mxu0 %v1792
      %1839 = vmatmul.bf16.gmra.mxu0 %v1810
      %v1840 = vpop.f32.mrf.mxu0
      %v1841 = vadd.f32 %v1744, %v1840
      %v1842 = vpop.f32.mrf.mxu0
      %1843 = vdwg.mxu0
      %v1844 = vmax.f32 %v1828, 0.0
      %v1845 = vmax.f32 %v1841, 0.0
      %v1848 = vrot.slane %v1845, 4
      %v1849 = vsel %vm455, %v1844, %v1848
      %1851 = vst [vmem:[%s430] sm:$0xff] %v1849
      %p1852 = scmp.lt.s32.totalorder %s23, 1
      %s1853 = scalar_select %p1852, %s23, 1
      %s1854 = smul.addr %s1853, 2
      %s1855 = smul.addr %s1854, 4
      %s1856 = scalar_lea.vmem %s12, %s1855
      // Predicated region
      $region69: #{dec_block_forward.1} parent=67 // pred_check
        %p1857 = pneg %p303
      $region70: #{dec_block_forward.1} parent=67 // pred_check_branch
        %1859 = sbr.rel (%p1857) target = $region72
      $region71: #{dec_block_forward.1} parent=67 // pred_region
        _
      $region72: #{dec_block_forward.1} parent=67 // pred_fallthru
        _
    $region68: #{dec_block_forward.1} parent=5 // pred_fallthru
      _
    %p1860 = scmp.le.s32.totalorder 2, %s18
    // Predicated region
    $region73: #{dec_block_forward.1} parent=5 // pred_check
      %p1861 = pneg %p1860
    $region74: #{dec_block_forward.1} parent=5 // pred_check_branch
      %1863 = sbr.rel (%p1861) target = $region76
    $region75: #{dec_block_forward.1} parent=5 // pred_region
      %s1864 = ssub.s32 %s18, 2
      // Predicated region
      $region77: #{dec_block_forward.1} parent=75 // pred_check
        %p1865 = pneg %p309
      $region78: #{dec_block_forward.1} parent=75 // pred_check_branch
        %1867 = sbr.rel (%p1865) target = $region80
      $region79: #{dec_block_forward.1} parent=75 // pred_region
        %p1868 = scmp.lt.s32.totalorder %s24, 1
        %s1869 = scalar_select %p1868, %s24, 1
        %s1870 = smul.addr %s1869, 2
        %s1871 = smul.addr %s1870, 4
        %s1872 = scalar_lea.vmem %s12, %s1871
      $region80: #{dec_block_forward.1} parent=75 // pred_fallthru
        _
    $region76: #{dec_block_forward.1} parent=5 // pred_fallthru
      _
  $region6: #{dec_block_forward.1} parent=0 // loop_footer
    %s22 = sadd.s32 1, %s18
  $region7: #{dec_block_forward.1} parent=0 // loop_footer_branch
    %17 = sbr.rel target = $region3
  $region8: #{dec_block_forward.1} parent=0 // loop_exit
    _

</llo_original>
